<compile_context>
chip_gen: v5e
topology: v5e:2x2
jax: 0.10.0
libtpu: 0.0.40
codegen_flags: <defaults>
</compile_context>

<pallas_src>
import functools

import jax
import jax.numpy as jnp
from jax import lax
from jax.experimental import pallas as pl
from jax.experimental.pallas import tpu as pltpu


def resblock_kernel(x_ref, p_ref, out_ref, *, nb, C, H, W):
    """One batch-block per grid step, packed as (nb*C, H*W).

    x_ref  : (nb*C, H*W)        packed activations (row n*C + c = image n, chan c)
    p_ref  : (nb*C, 2*9*C + 2)  lane-dense parameter tile [wa | wb | ba | bo]
             wa[n*C+co, t*C+ci] = w_a[dy, dx, ci, co]  with t = dy*3 + dx
    out_ref: (nb*C, H*W)
    """
    HW = H * W
    NC = nb * C
    K = 9 * C

    x = x_ref[...].astype(jnp.float32)            # (NC, HW), all 8 sublanes full
    p = p_ref[...].astype(jnp.float32)            # (NC, 2K+2), single vreg-pair
    wa = p[:, 0:K]                                # (NC, 9*C)
    wb = p[:, K:2 * K]
    ba = p[:, 2 * K:2 * K + 1]                    # (NC, 1) SReLU bias after conv_a
    bo = p[:, 2 * K + 1:2 * K + 2]                # (NC, 1) SReLU bias after residual

    # Border masks, computed once per call (dx / dy wrap of the lane rolls).
    pos = lax.broadcasted_iota(jnp.int32, (NC, HW), 1)
    if (W & (W - 1)) == 0:
        xcol = pos & (W - 1)                      # power-of-two fast path
    else:
        xcol = pos % W
    m_left = xcol >= 1                            # tap dx == 0 valid here
    m_right = xcol <= W - 2                       # tap dx == 2 valid here
    m_top = pos >= W                              # tap dy == 0 valid here
    m_bot = pos < (H - 1) * W                     # tap dy == 2 valid here

    # Per-row image selector (which of the nb packed images a sublane belongs to).
    row = lax.broadcasted_iota(jnp.int32, (NC, HW), 0)

    def channel_broadcast(v, ci):
        """(NC, HW) slab whose row n*C+co holds v[n*C+ci] (per-image channel bcast)."""
        b = jnp.broadcast_to(v[ci:ci + 1, :], (NC, HW))
        for n in range(1, nb):
            bn = jnp.broadcast_to(v[n * C + ci:n * C + ci + 1, :], (NC, HW))
            b = jnp.where(row >= n * C, bn, b)
        return b

    def conv3x3(v, w):
        """3x3 'SAME' conv on the packed slab: pure VPU FMAs + one lane roll/tap."""
        bcast = [channel_broadcast(v, ci) for ci in range(C)]     # built once
        acc = None
        for dy in range(3):
            for dx in range(3):
                t = dy * 3 + dx
                # Channel mix first (per-sublane weight, roll commutes with it).
                s = None
                for ci in range(C):
                    wcol = w[:, t * C + ci:t * C + ci + 1]        # (NC, 1)
                    term = bcast[ci] * wcol                       # lane-bcast FMA
                    s = term if s is None else s + term
                # Tap shift: out[:, f] = mixed[:, f + off]; wrap removed by masks.
                off = (dy - 1) * W + (dx - 1)
                if off != 0:
                    s = jnp.roll(s, -off, axis=-1)                # lane rotate
                m = None
                if dy == 0:
                    m = m_top
                elif dy == 2:
                    m = m_bot
                if dx == 0:
                    m = m_left if m is None else (m & m_left)
                elif dx == 2:
                    m = m_right if m is None else (m & m_right)
                if m is not None:
                    s = jnp.where(m, s, 0.0)
                acc = s if acc is None else acc + s
        return acc

    # conv_a -> SReLU_a
    a = conv3x3(x, wa)
    a = jnp.maximum(a - ba, 0.0) + ba

    # conv_b -> identity skip -> SReLU_out
    f2 = conv3x3(a, wb)
    y = x + f2
    y = jnp.maximum(y - bo, 0.0) + bo

    out_ref[...] = y.astype(out_ref.dtype)        # lane-dense, unmasked store


def resblock_forward(x_nchw, wa, wb, ba, bo):
    """x_nchw: (N, C, H, W) f32; wa/wb: (3, 3, C, C) HWIO (bias-free convs);
    ba/bo: (1, C, 1, 1) SReLU biases.  Returns (N, C, H, W) f32."""
    N, C, H, W = x_nchw.shape
    HW = H * W
    Cout = wa.shape[-1]
    assert Cout == C, "identity-skip ResBlock requires w_in == w_out"

    # Images per grid step: pack enough images to fill all 8 vreg sublanes.
    nb = 1
    if C < 8:
        nb = min(N, max(1, 8 // C))
        while N % nb:
            nb -= 1
    NC = nb * C
    K = 9 * C

    # One lane-dense parameter tile: [wa | wb | ba | bo] -> (nb*C, 2*9*C + 2).
    def pack_w(w):
        wp = jnp.transpose(w.reshape(9, C, Cout), (2, 0, 1)).reshape(Cout, K)
        return jnp.tile(wp, (nb, 1))              # (nb*Cout, 9*Cin)

    params = jnp.concatenate(
        [pack_w(wa), pack_w(wb),
         jnp.tile(ba.reshape(Cout, 1), (nb, 1)),
         jnp.tile(bo.reshape(Cout, 1), (nb, 1))], axis=1)

    # Free, contiguous reshape only -- no transposes, no padding passes in HBM.
    x_flat = x_nchw.reshape(N * C, HW)

    kernel = functools.partial(resblock_kernel, nb=nb, C=C, H=H, W=W)
    out_flat = pl.pallas_call(
        kernel,
        out_shape=jax.ShapeDtypeStruct((N * C, HW), x_nchw.dtype),
        grid=(N // nb,),
        in_specs=[
            pl.BlockSpec((NC, HW), lambda i: (i, 0)),
            pl.BlockSpec((NC, 2 * K + 2), lambda i: (0, 0)),
        ],
        out_specs=pl.BlockSpec((NC, HW), lambda i: (i, 0)),
        compiler_params=pltpu.CompilerParams(
            # Whole (tiny) batch in one step: no 2-TC split, it is overhead-bound.
            dimension_semantics=("arbitrary",),
            vmem_limit_bytes=2 * 1024 * 1024,     # right-sized (real footprint ~tens of KiB)
        ),
    )(x_flat, params)

    return out_flat.reshape(N, C, H, W)


def resblock_reference(x, wa, wb, ba, bo):
    """Pure-JAX reference (lax.conv, f32-accurate) for verification."""
    dn = ("NCHW", "HWIO", "NCHW")
    a = lax.conv_general_dilated(x, wa, (1, 1), "SAME", dimension_numbers=dn,
                                 precision=lax.Precision.HIGHEST)
    a = jnp.maximum(a - ba, 0.0) + ba
    b = lax.conv_general_dilated(a, wb, (1, 1), "SAME", dimension_numbers=dn,
                                 precision=lax.Precision.HIGHEST)
    y = x + b
    return jnp.maximum(y - bo, 0.0) + bo


if __name__ == "__main__":
    # Small shapes consistent with the module: N=2, w_in=w_out=4, 16x16 spatial.
    N, C, H, W = 2, 4, 16, 16
    key = jax.random.PRNGKey(0)
    kx, ka, kb = jax.random.split(key, 3)

    x = jax.random.normal(kx, (N, C, H, W), dtype=jnp.float32)

    # Deterministic synthetic parameters (conv layers have bias=False here).
    wa = jax.random.normal(ka, (3, 3, C, C), dtype=jnp.float32) * 0.1   # HWIO
    wb = jax.random.normal(kb, (3, 3, C, C), dtype=jnp.float32) * 0.1   # HWIO
    ba = jnp.full((1, C, 1, 1), -1.0, dtype=jnp.float32)  # SReLU bias (init -1.0)
    bo = jnp.full((1, C, 1, 1), -1.0, dtype=jnp.float32)  # SReLU bias (init -1.0)

    out = jax.jit(resblock_forward)(x, wa, wb, ba, bo)
    out = jax.block_until_ready(out)

    ref = resblock_reference(x, wa, wb, ba, bo)
    assert out.shape == (N, C, H, W)
    assert jnp.allclose(out, ref, atol=1e-4, rtol=1e-4), "mismatch vs reference"

    print("KERNEL_OK")
</pallas_src>

<mosaic_0001>
module attributes {stable_mosaic.version = 11 : i64} {
  func.func @resblock_kernel(%arg0: i32, %arg1: memref<8x256xf32, #tpu.memory_space<vmem>>, %arg2: memref<8x74xf32, #tpu.memory_space<vmem>>, %arg3: memref<8x256xf32, #tpu.memory_space<vmem>>) attributes {dimension_semantics = [#tpu.dimension_semantics<arbitrary>], iteration_bounds = array<i64: 1>, scalar_prefetch = 0 : i64, scratch_operands = 0 : i64, tpu.core_type = #tpu.core_type<tc>, window_params = [{transform_indices = @transform_0, window_bounds = array<i64: 8, 256>}, {pipeline_mode = #tpu.pipeline_mode<synchronous>, transform_indices = @transform_1, window_bounds = array<i64: 8, 74>}, {transform_indices = @transform_2, window_bounds = array<i64: 8, 256>}]} {
    %c0 = arith.constant 0 : index
    %c0_0 = arith.constant 0 : index
    %0 = vector.load %arg1[%c0, %c0_0] : memref<8x256xf32, #tpu.memory_space<vmem>>, vector<8x256xf32>
    %c0_1 = arith.constant 0 : index
    %c0_2 = arith.constant 0 : index
    %1 = vector.load %arg2[%c0_1, %c0_2] : memref<8x74xf32, #tpu.memory_space<vmem>>, vector<8x74xf32>
    %2 = vector.extract_strided_slice %1 {offsets = [0, 0], sizes = [8, 36], strides = [1, 1]} : vector<8x74xf32> to vector<8x36xf32>
    %3 = vector.extract_strided_slice %1 {offsets = [0, 36], sizes = [8, 36], strides = [1, 1]} : vector<8x74xf32> to vector<8x36xf32>
    %4 = vector.extract_strided_slice %1 {offsets = [0, 72], sizes = [8, 1], strides = [1, 1]} : vector<8x74xf32> to vector<8x1xf32>
    %5 = vector.extract_strided_slice %1 {offsets = [0, 73], sizes = [8, 1], strides = [1, 1]} : vector<8x74xf32> to vector<8x1xf32>
    %6 = tpu.iota {dimensions = array<i32: 1>} : vector<8x256xi32>
    %c15_i32 = arith.constant 15 : i32
    %7 = vector.broadcast %c15_i32 : i32 to vector<8x256xi32>
    %8 = arith.andi %6, %7 : vector<8x256xi32>
    %c1_i32 = arith.constant 1 : i32
    %9 = vector.broadcast %c1_i32 : i32 to vector<8x256xi32>
    %10 = arith.cmpi sge, %8, %9 : vector<8x256xi32>
    %c14_i32 = arith.constant 14 : i32
    %11 = vector.broadcast %c14_i32 : i32 to vector<8x256xi32>
    %12 = arith.cmpi sle, %8, %11 : vector<8x256xi32>
    %c16_i32 = arith.constant 16 : i32
    %13 = vector.broadcast %c16_i32 : i32 to vector<8x256xi32>
    %14 = arith.cmpi sge, %6, %13 : vector<8x256xi32>
    %c240_i32 = arith.constant 240 : i32
    %15 = vector.broadcast %c240_i32 : i32 to vector<8x256xi32>
    %16 = arith.cmpi slt, %6, %15 : vector<8x256xi32>
    %17 = tpu.iota {dimensions = array<i32: 0>} : vector<8x256xi32>
    %18 = vector.extract_strided_slice %0 {offsets = [0, 0], sizes = [1, 256], strides = [1, 1]} : vector<8x256xf32> to vector<1x256xf32>
    %19 = vector.shape_cast %18 : vector<1x256xf32> to vector<1x256xf32>
    %20 = vector.broadcast %19 : vector<1x256xf32> to vector<8x256xf32>
    %21 = vector.extract_strided_slice %0 {offsets = [4, 0], sizes = [1, 256], strides = [1, 1]} : vector<8x256xf32> to vector<1x256xf32>
    %22 = vector.shape_cast %21 : vector<1x256xf32> to vector<1x256xf32>
    %23 = vector.broadcast %22 : vector<1x256xf32> to vector<8x256xf32>
    %c4_i32 = arith.constant 4 : i32
    %24 = vector.broadcast %c4_i32 : i32 to vector<8x256xi32>
    %25 = arith.cmpi sge, %17, %24 : vector<8x256xi32>
    %26 = arith.select %25, %23, %20 : vector<8x256xi1>, vector<8x256xf32>
    %27 = vector.extract_strided_slice %0 {offsets = [1, 0], sizes = [1, 256], strides = [1, 1]} : vector<8x256xf32> to vector<1x256xf32>
    %28 = vector.shape_cast %27 : vector<1x256xf32> to vector<1x256xf32>
    %29 = vector.broadcast %28 : vector<1x256xf32> to vector<8x256xf32>
    %30 = vector.extract_strided_slice %0 {offsets = [5, 0], sizes = [1, 256], strides = [1, 1]} : vector<8x256xf32> to vector<1x256xf32>
    %31 = vector.shape_cast %30 : vector<1x256xf32> to vector<1x256xf32>
    %32 = vector.broadcast %31 : vector<1x256xf32> to vector<8x256xf32>
    %c4_i32_3 = arith.constant 4 : i32
    %33 = vector.broadcast %c4_i32_3 : i32 to vector<8x256xi32>
    %34 = arith.cmpi sge, %17, %33 : vector<8x256xi32>
    %35 = arith.select %34, %32, %29 : vector<8x256xi1>, vector<8x256xf32>
    %36 = vector.extract_strided_slice %0 {offsets = [2, 0], sizes = [1, 256], strides = [1, 1]} : vector<8x256xf32> to vector<1x256xf32>
    %37 = vector.shape_cast %36 : vector<1x256xf32> to vector<1x256xf32>
    %38 = vector.broadcast %37 : vector<1x256xf32> to vector<8x256xf32>
    %39 = vector.extract_strided_slice %0 {offsets = [6, 0], sizes = [1, 256], strides = [1, 1]} : vector<8x256xf32> to vector<1x256xf32>
    %40 = vector.shape_cast %39 : vector<1x256xf32> to vector<1x256xf32>
    %41 = vector.broadcast %40 : vector<1x256xf32> to vector<8x256xf32>
    %c4_i32_4 = arith.constant 4 : i32
    %42 = vector.broadcast %c4_i32_4 : i32 to vector<8x256xi32>
    %43 = arith.cmpi sge, %17, %42 : vector<8x256xi32>
    %44 = arith.select %43, %41, %38 : vector<8x256xi1>, vector<8x256xf32>
    %45 = vector.extract_strided_slice %0 {offsets = [3, 0], sizes = [1, 256], strides = [1, 1]} : vector<8x256xf32> to vector<1x256xf32>
    %46 = vector.shape_cast %45 : vector<1x256xf32> to vector<1x256xf32>
    %47 = vector.broadcast %46 : vector<1x256xf32> to vector<8x256xf32>
    %48 = vector.extract_strided_slice %0 {offsets = [7, 0], sizes = [1, 256], strides = [1, 1]} : vector<8x256xf32> to vector<1x256xf32>
    %49 = vector.shape_cast %48 : vector<1x256xf32> to vector<1x256xf32>
    %50 = vector.broadcast %49 : vector<1x256xf32> to vector<8x256xf32>
    %c4_i32_5 = arith.constant 4 : i32
    %51 = vector.broadcast %c4_i32_5 : i32 to vector<8x256xi32>
    %52 = arith.cmpi sge, %17, %51 : vector<8x256xi32>
    %53 = arith.select %52, %50, %47 : vector<8x256xi1>, vector<8x256xf32>
    %54 = vector.extract_strided_slice %2 {offsets = [0, 0], sizes = [8, 1], strides = [1, 1]} : vector<8x36xf32> to vector<8x1xf32>
    %55 = vector.broadcast %54 : vector<8x1xf32> to vector<8x256xf32>
    %56 = arith.mulf %26, %55 : vector<8x256xf32>
    %57 = vector.extract_strided_slice %2 {offsets = [0, 1], sizes = [8, 1], strides = [1, 1]} : vector<8x36xf32> to vector<8x1xf32>
    %58 = vector.broadcast %57 : vector<8x1xf32> to vector<8x256xf32>
    %59 = arith.mulf %35, %58 : vector<8x256xf32>
    %60 = arith.addf %56, %59 : vector<8x256xf32>
    %61 = vector.extract_strided_slice %2 {offsets = [0, 2], sizes = [8, 1], strides = [1, 1]} : vector<8x36xf32> to vector<8x1xf32>
    %62 = vector.broadcast %61 : vector<8x1xf32> to vector<8x256xf32>
    %63 = arith.mulf %44, %62 : vector<8x256xf32>
    %64 = arith.addf %60, %63 : vector<8x256xf32>
    %65 = vector.extract_strided_slice %2 {offsets = [0, 3], sizes = [8, 1], strides = [1, 1]} : vector<8x36xf32> to vector<8x1xf32>
    %66 = vector.broadcast %65 : vector<8x1xf32> to vector<8x256xf32>
    %67 = arith.mulf %53, %66 : vector<8x256xf32>
    %68 = arith.addf %64, %67 : vector<8x256xf32>
    %69 = vector.extract_strided_slice %68 {offsets = [0, 239], sizes = [8, 17], strides = [1, 1]} : vector<8x256xf32> to vector<8x17xf32>
    %70 = vector.extract_strided_slice %68 {offsets = [0, 0], sizes = [8, 239], strides = [1, 1]} : vector<8x256xf32> to vector<8x239xf32>
    %71 = tpu.concatenate %69, %70 in 1 : vector<8x17xf32>, vector<8x239xf32> -> vector<8x256xf32>
    %72 = arith.andi %14, %10 : vector<8x256xi1>
    %cst = arith.constant 0.000000e+00 : f32
    %73 = vector.broadcast %cst : f32 to vector<8x256xf32>
    %74 = arith.select %72, %71, %73 : vector<8x256xi1>, vector<8x256xf32>
    %75 = vector.extract_strided_slice %2 {offsets = [0, 4], sizes = [8, 1], strides = [1, 1]} : vector<8x36xf32> to vector<8x1xf32>
    %76 = vector.broadcast %75 : vector<8x1xf32> to vector<8x256xf32>
    %77 = arith.mulf %26, %76 : vector<8x256xf32>
    %78 = vector.extract_strided_slice %2 {offsets = [0, 5], sizes = [8, 1], strides = [1, 1]} : vector<8x36xf32> to vector<8x1xf32>
    %79 = vector.broadcast %78 : vector<8x1xf32> to vector<8x256xf32>
    %80 = arith.mulf %35, %79 : vector<8x256xf32>
    %81 = arith.addf %77, %80 : vector<8x256xf32>
    %82 = vector.extract_strided_slice %2 {offsets = [0, 6], sizes = [8, 1], strides = [1, 1]} : vector<8x36xf32> to vector<8x1xf32>
    %83 = vector.broadcast %82 : vector<8x1xf32> to vector<8x256xf32>
    %84 = arith.mulf %44, %83 : vector<8x256xf32>
    %85 = arith.addf %81, %84 : vector<8x256xf32>
    %86 = vector.extract_strided_slice %2 {offsets = [0, 7], sizes = [8, 1], strides = [1, 1]} : vector<8x36xf32> to vector<8x1xf32>
    %87 = vector.broadcast %86 : vector<8x1xf32> to vector<8x256xf32>
    %88 = arith.mulf %53, %87 : vector<8x256xf32>
    %89 = arith.addf %85, %88 : vector<8x256xf32>
    %90 = vector.extract_strided_slice %89 {offsets = [0, 240], sizes = [8, 16], strides = [1, 1]} : vector<8x256xf32> to vector<8x16xf32>
    %91 = vector.extract_strided_slice %89 {offsets = [0, 0], sizes = [8, 240], strides = [1, 1]} : vector<8x256xf32> to vector<8x240xf32>
    %92 = tpu.concatenate %90, %91 in 1 : vector<8x16xf32>, vector<8x240xf32> -> vector<8x256xf32>
    %cst_6 = arith.constant 0.000000e+00 : f32
    %93 = vector.broadcast %cst_6 : f32 to vector<8x256xf32>
    %94 = arith.select %14, %92, %93 : vector<8x256xi1>, vector<8x256xf32>
    %95 = arith.addf %74, %94 : vector<8x256xf32>
    %96 = vector.extract_strided_slice %2 {offsets = [0, 8], sizes = [8, 1], strides = [1, 1]} : vector<8x36xf32> to vector<8x1xf32>
    %97 = vector.broadcast %96 : vector<8x1xf32> to vector<8x256xf32>
    %98 = arith.mulf %26, %97 : vector<8x256xf32>
    %99 = vector.extract_strided_slice %2 {offsets = [0, 9], sizes = [8, 1], strides = [1, 1]} : vector<8x36xf32> to vector<8x1xf32>
    %100 = vector.broadcast %99 : vector<8x1xf32> to vector<8x256xf32>
    %101 = arith.mulf %35, %100 : vector<8x256xf32>
    %102 = arith.addf %98, %101 : vector<8x256xf32>
    %103 = vector.extract_strided_slice %2 {offsets = [0, 10], sizes = [8, 1], strides = [1, 1]} : vector<8x36xf32> to vector<8x1xf32>
    %104 = vector.broadcast %103 : vector<8x1xf32> to vector<8x256xf32>
    %105 = arith.mulf %44, %104 : vector<8x256xf32>
    %106 = arith.addf %102, %105 : vector<8x256xf32>
    %107 = vector.extract_strided_slice %2 {offsets = [0, 11], sizes = [8, 1], strides = [1, 1]} : vector<8x36xf32> to vector<8x1xf32>
    %108 = vector.broadcast %107 : vector<8x1xf32> to vector<8x256xf32>
    %109 = arith.mulf %53, %108 : vector<8x256xf32>
    %110 = arith.addf %106, %109 : vector<8x256xf32>
    %111 = vector.extract_strided_slice %110 {offsets = [0, 241], sizes = [8, 15], strides = [1, 1]} : vector<8x256xf32> to vector<8x15xf32>
    %112 = vector.extract_strided_slice %110 {offsets = [0, 0], sizes = [8, 241], strides = [1, 1]} : vector<8x256xf32> to vector<8x241xf32>
    %113 = tpu.concatenate %111, %112 in 1 : vector<8x15xf32>, vector<8x241xf32> -> vector<8x256xf32>
    %114 = arith.andi %14, %12 : vector<8x256xi1>
    %cst_7 = arith.constant 0.000000e+00 : f32
    %115 = vector.broadcast %cst_7 : f32 to vector<8x256xf32>
    %116 = arith.select %114, %113, %115 : vector<8x256xi1>, vector<8x256xf32>
    %117 = arith.addf %95, %116 : vector<8x256xf32>
    %118 = vector.extract_strided_slice %2 {offsets = [0, 12], sizes = [8, 1], strides = [1, 1]} : vector<8x36xf32> to vector<8x1xf32>
    %119 = vector.broadcast %118 : vector<8x1xf32> to vector<8x256xf32>
    %120 = arith.mulf %26, %119 : vector<8x256xf32>
    %121 = vector.extract_strided_slice %2 {offsets = [0, 13], sizes = [8, 1], strides = [1, 1]} : vector<8x36xf32> to vector<8x1xf32>
    %122 = vector.broadcast %121 : vector<8x1xf32> to vector<8x256xf32>
    %123 = arith.mulf %35, %122 : vector<8x256xf32>
    %124 = arith.addf %120, %123 : vector<8x256xf32>
    %125 = vector.extract_strided_slice %2 {offsets = [0, 14], sizes = [8, 1], strides = [1, 1]} : vector<8x36xf32> to vector<8x1xf32>
    %126 = vector.broadcast %125 : vector<8x1xf32> to vector<8x256xf32>
    %127 = arith.mulf %44, %126 : vector<8x256xf32>
    %128 = arith.addf %124, %127 : vector<8x256xf32>
    %129 = vector.extract_strided_slice %2 {offsets = [0, 15], sizes = [8, 1], strides = [1, 1]} : vector<8x36xf32> to vector<8x1xf32>
    %130 = vector.broadcast %129 : vector<8x1xf32> to vector<8x256xf32>
    %131 = arith.mulf %53, %130 : vector<8x256xf32>
    %132 = arith.addf %128, %131 : vector<8x256xf32>
    %133 = vector.extract_strided_slice %132 {offsets = [0, 255], sizes = [8, 1], strides = [1, 1]} : vector<8x256xf32> to vector<8x1xf32>
    %134 = vector.extract_strided_slice %132 {offsets = [0, 0], sizes = [8, 255], strides = [1, 1]} : vector<8x256xf32> to vector<8x255xf32>
    %135 = tpu.concatenate %133, %134 in 1 : vector<8x1xf32>, vector<8x255xf32> -> vector<8x256xf32>
    %cst_8 = arith.constant 0.000000e+00 : f32
    %136 = vector.broadcast %cst_8 : f32 to vector<8x256xf32>
    %137 = arith.select %10, %135, %136 : vector<8x256xi1>, vector<8x256xf32>
    %138 = arith.addf %117, %137 : vector<8x256xf32>
    %139 = vector.extract_strided_slice %2 {offsets = [0, 16], sizes = [8, 1], strides = [1, 1]} : vector<8x36xf32> to vector<8x1xf32>
    %140 = vector.broadcast %139 : vector<8x1xf32> to vector<8x256xf32>
    %141 = arith.mulf %26, %140 : vector<8x256xf32>
    %142 = vector.extract_strided_slice %2 {offsets = [0, 17], sizes = [8, 1], strides = [1, 1]} : vector<8x36xf32> to vector<8x1xf32>
    %143 = vector.broadcast %142 : vector<8x1xf32> to vector<8x256xf32>
    %144 = arith.mulf %35, %143 : vector<8x256xf32>
    %145 = arith.addf %141, %144 : vector<8x256xf32>
    %146 = vector.extract_strided_slice %2 {offsets = [0, 18], sizes = [8, 1], strides = [1, 1]} : vector<8x36xf32> to vector<8x1xf32>
    %147 = vector.broadcast %146 : vector<8x1xf32> to vector<8x256xf32>
    %148 = arith.mulf %44, %147 : vector<8x256xf32>
    %149 = arith.addf %145, %148 : vector<8x256xf32>
    %150 = vector.extract_strided_slice %2 {offsets = [0, 19], sizes = [8, 1], strides = [1, 1]} : vector<8x36xf32> to vector<8x1xf32>
    %151 = vector.broadcast %150 : vector<8x1xf32> to vector<8x256xf32>
    %152 = arith.mulf %53, %151 : vector<8x256xf32>
    %153 = arith.addf %149, %152 : vector<8x256xf32>
    %154 = arith.addf %138, %153 : vector<8x256xf32>
    %155 = vector.extract_strided_slice %2 {offsets = [0, 20], sizes = [8, 1], strides = [1, 1]} : vector<8x36xf32> to vector<8x1xf32>
    %156 = vector.broadcast %155 : vector<8x1xf32> to vector<8x256xf32>
    %157 = arith.mulf %26, %156 : vector<8x256xf32>
    %158 = vector.extract_strided_slice %2 {offsets = [0, 21], sizes = [8, 1], strides = [1, 1]} : vector<8x36xf32> to vector<8x1xf32>
    %159 = vector.broadcast %158 : vector<8x1xf32> to vector<8x256xf32>
    %160 = arith.mulf %35, %159 : vector<8x256xf32>
    %161 = arith.addf %157, %160 : vector<8x256xf32>
    %162 = vector.extract_strided_slice %2 {offsets = [0, 22], sizes = [8, 1], strides = [1, 1]} : vector<8x36xf32> to vector<8x1xf32>
    %163 = vector.broadcast %162 : vector<8x1xf32> to vector<8x256xf32>
    %164 = arith.mulf %44, %163 : vector<8x256xf32>
    %165 = arith.addf %161, %164 : vector<8x256xf32>
    %166 = vector.extract_strided_slice %2 {offsets = [0, 23], sizes = [8, 1], strides = [1, 1]} : vector<8x36xf32> to vector<8x1xf32>
    %167 = vector.broadcast %166 : vector<8x1xf32> to vector<8x256xf32>
    %168 = arith.mulf %53, %167 : vector<8x256xf32>
    %169 = arith.addf %165, %168 : vector<8x256xf32>
    %170 = vector.extract_strided_slice %169 {offsets = [0, 1], sizes = [8, 255], strides = [1, 1]} : vector<8x256xf32> to vector<8x255xf32>
    %171 = vector.extract_strided_slice %169 {offsets = [0, 0], sizes = [8, 1], strides = [1, 1]} : vector<8x256xf32> to vector<8x1xf32>
    %172 = tpu.concatenate %170, %171 in 1 : vector<8x255xf32>, vector<8x1xf32> -> vector<8x256xf32>
    %cst_9 = arith.constant 0.000000e+00 : f32
    %173 = vector.broadcast %cst_9 : f32 to vector<8x256xf32>
    %174 = arith.select %12, %172, %173 : vector<8x256xi1>, vector<8x256xf32>
    %175 = arith.addf %154, %174 : vector<8x256xf32>
    %176 = vector.extract_strided_slice %2 {offsets = [0, 24], sizes = [8, 1], strides = [1, 1]} : vector<8x36xf32> to vector<8x1xf32>
    %177 = vector.broadcast %176 : vector<8x1xf32> to vector<8x256xf32>
    %178 = arith.mulf %26, %177 : vector<8x256xf32>
    %179 = vector.extract_strided_slice %2 {offsets = [0, 25], sizes = [8, 1], strides = [1, 1]} : vector<8x36xf32> to vector<8x1xf32>
    %180 = vector.broadcast %179 : vector<8x1xf32> to vector<8x256xf32>
    %181 = arith.mulf %35, %180 : vector<8x256xf32>
    %182 = arith.addf %178, %181 : vector<8x256xf32>
    %183 = vector.extract_strided_slice %2 {offsets = [0, 26], sizes = [8, 1], strides = [1, 1]} : vector<8x36xf32> to vector<8x1xf32>
    %184 = vector.broadcast %183 : vector<8x1xf32> to vector<8x256xf32>
    %185 = arith.mulf %44, %184 : vector<8x256xf32>
    %186 = arith.addf %182, %185 : vector<8x256xf32>
    %187 = vector.extract_strided_slice %2 {offsets = [0, 27], sizes = [8, 1], strides = [1, 1]} : vector<8x36xf32> to vector<8x1xf32>
    %188 = vector.broadcast %187 : vector<8x1xf32> to vector<8x256xf32>
    %189 = arith.mulf %53, %188 : vector<8x256xf32>
    %190 = arith.addf %186, %189 : vector<8x256xf32>
    %191 = vector.extract_strided_slice %190 {offsets = [0, 15], sizes = [8, 241], strides = [1, 1]} : vector<8x256xf32> to vector<8x241xf32>
    %192 = vector.extract_strided_slice %190 {offsets = [0, 0], sizes = [8, 15], strides = [1, 1]} : vector<8x256xf32> to vector<8x15xf32>
    %193 = tpu.concatenate %191, %192 in 1 : vector<8x241xf32>, vector<8x15xf32> -> vector<8x256xf32>
    %194 = arith.andi %16, %10 : vector<8x256xi1>
    %cst_10 = arith.constant 0.000000e+00 : f32
    %195 = vector.broadcast %cst_10 : f32 to vector<8x256xf32>
    %196 = arith.select %194, %193, %195 : vector<8x256xi1>, vector<8x256xf32>
    %197 = arith.addf %175, %196 : vector<8x256xf32>
    %198 = vector.extract_strided_slice %2 {offsets = [0, 28], sizes = [8, 1], strides = [1, 1]} : vector<8x36xf32> to vector<8x1xf32>
    %199 = vector.broadcast %198 : vector<8x1xf32> to vector<8x256xf32>
    %200 = arith.mulf %26, %199 : vector<8x256xf32>
    %201 = vector.extract_strided_slice %2 {offsets = [0, 29], sizes = [8, 1], strides = [1, 1]} : vector<8x36xf32> to vector<8x1xf32>
    %202 = vector.broadcast %201 : vector<8x1xf32> to vector<8x256xf32>
    %203 = arith.mulf %35, %202 : vector<8x256xf32>
    %204 = arith.addf %200, %203 : vector<8x256xf32>
    %205 = vector.extract_strided_slice %2 {offsets = [0, 30], sizes = [8, 1], strides = [1, 1]} : vector<8x36xf32> to vector<8x1xf32>
    %206 = vector.broadcast %205 : vector<8x1xf32> to vector<8x256xf32>
    %207 = arith.mulf %44, %206 : vector<8x256xf32>
    %208 = arith.addf %204, %207 : vector<8x256xf32>
    %209 = vector.extract_strided_slice %2 {offsets = [0, 31], sizes = [8, 1], strides = [1, 1]} : vector<8x36xf32> to vector<8x1xf32>
    %210 = vector.broadcast %209 : vector<8x1xf32> to vector<8x256xf32>
    %211 = arith.mulf %53, %210 : vector<8x256xf32>
    %212 = arith.addf %208, %211 : vector<8x256xf32>
    %213 = vector.extract_strided_slice %212 {offsets = [0, 16], sizes = [8, 240], strides = [1, 1]} : vector<8x256xf32> to vector<8x240xf32>
    %214 = vector.extract_strided_slice %212 {offsets = [0, 0], sizes = [8, 16], strides = [1, 1]} : vector<8x256xf32> to vector<8x16xf32>
    %215 = tpu.concatenate %213, %214 in 1 : vector<8x240xf32>, vector<8x16xf32> -> vector<8x256xf32>
    %cst_11 = arith.constant 0.000000e+00 : f32
    %216 = vector.broadcast %cst_11 : f32 to vector<8x256xf32>
    %217 = arith.select %16, %215, %216 : vector<8x256xi1>, vector<8x256xf32>
    %218 = arith.addf %197, %217 : vector<8x256xf32>
    %219 = vector.extract_strided_slice %2 {offsets = [0, 32], sizes = [8, 1], strides = [1, 1]} : vector<8x36xf32> to vector<8x1xf32>
    %220 = vector.broadcast %219 : vector<8x1xf32> to vector<8x256xf32>
    %221 = arith.mulf %26, %220 : vector<8x256xf32>
    %222 = vector.extract_strided_slice %2 {offsets = [0, 33], sizes = [8, 1], strides = [1, 1]} : vector<8x36xf32> to vector<8x1xf32>
    %223 = vector.broadcast %222 : vector<8x1xf32> to vector<8x256xf32>
    %224 = arith.mulf %35, %223 : vector<8x256xf32>
    %225 = arith.addf %221, %224 : vector<8x256xf32>
    %226 = vector.extract_strided_slice %2 {offsets = [0, 34], sizes = [8, 1], strides = [1, 1]} : vector<8x36xf32> to vector<8x1xf32>
    %227 = vector.broadcast %226 : vector<8x1xf32> to vector<8x256xf32>
    %228 = arith.mulf %44, %227 : vector<8x256xf32>
    %229 = arith.addf %225, %228 : vector<8x256xf32>
    %230 = vector.extract_strided_slice %2 {offsets = [0, 35], sizes = [8, 1], strides = [1, 1]} : vector<8x36xf32> to vector<8x1xf32>
    %231 = vector.broadcast %230 : vector<8x1xf32> to vector<8x256xf32>
    %232 = arith.mulf %53, %231 : vector<8x256xf32>
    %233 = arith.addf %229, %232 : vector<8x256xf32>
    %234 = vector.extract_strided_slice %233 {offsets = [0, 17], sizes = [8, 239], strides = [1, 1]} : vector<8x256xf32> to vector<8x239xf32>
    %235 = vector.extract_strided_slice %233 {offsets = [0, 0], sizes = [8, 17], strides = [1, 1]} : vector<8x256xf32> to vector<8x17xf32>
    %236 = tpu.concatenate %234, %235 in 1 : vector<8x239xf32>, vector<8x17xf32> -> vector<8x256xf32>
    %237 = arith.andi %16, %12 : vector<8x256xi1>
    %cst_12 = arith.constant 0.000000e+00 : f32
    %238 = vector.broadcast %cst_12 : f32 to vector<8x256xf32>
    %239 = arith.select %237, %236, %238 : vector<8x256xi1>, vector<8x256xf32>
    %240 = arith.addf %218, %239 : vector<8x256xf32>
    %241 = vector.broadcast %4 : vector<8x1xf32> to vector<8x256xf32>
    %242 = arith.subf %240, %241 : vector<8x256xf32>
    %cst_13 = arith.constant 0.000000e+00 : f32
    %243 = vector.broadcast %cst_13 : f32 to vector<8x256xf32>
    %244 = arith.maximumf %242, %243 : vector<8x256xf32>
    %245 = vector.broadcast %4 : vector<8x1xf32> to vector<8x256xf32>
    %246 = arith.addf %244, %245 : vector<8x256xf32>
    %247 = vector.extract_strided_slice %246 {offsets = [0, 0], sizes = [1, 256], strides = [1, 1]} : vector<8x256xf32> to vector<1x256xf32>
    %248 = vector.shape_cast %247 : vector<1x256xf32> to vector<1x256xf32>
    %249 = vector.broadcast %248 : vector<1x256xf32> to vector<8x256xf32>
    %250 = vector.extract_strided_slice %246 {offsets = [4, 0], sizes = [1, 256], strides = [1, 1]} : vector<8x256xf32> to vector<1x256xf32>
    %251 = vector.shape_cast %250 : vector<1x256xf32> to vector<1x256xf32>
    %252 = vector.broadcast %251 : vector<1x256xf32> to vector<8x256xf32>
    %c4_i32_14 = arith.constant 4 : i32
    %253 = vector.broadcast %c4_i32_14 : i32 to vector<8x256xi32>
    %254 = arith.cmpi sge, %17, %253 : vector<8x256xi32>
    %255 = arith.select %254, %252, %249 : vector<8x256xi1>, vector<8x256xf32>
    %256 = vector.extract_strided_slice %246 {offsets = [1, 0], sizes = [1, 256], strides = [1, 1]} : vector<8x256xf32> to vector<1x256xf32>
    %257 = vector.shape_cast %256 : vector<1x256xf32> to vector<1x256xf32>
    %258 = vector.broadcast %257 : vector<1x256xf32> to vector<8x256xf32>
    %259 = vector.extract_strided_slice %246 {offsets = [5, 0], sizes = [1, 256], strides = [1, 1]} : vector<8x256xf32> to vector<1x256xf32>
    %260 = vector.shape_cast %259 : vector<1x256xf32> to vector<1x256xf32>
    %261 = vector.broadcast %260 : vector<1x256xf32> to vector<8x256xf32>
    %c4_i32_15 = arith.constant 4 : i32
    %262 = vector.broadcast %c4_i32_15 : i32 to vector<8x256xi32>
    %263 = arith.cmpi sge, %17, %262 : vector<8x256xi32>
    %264 = arith.select %263, %261, %258 : vector<8x256xi1>, vector<8x256xf32>
    %265 = vector.extract_strided_slice %246 {offsets = [2, 0], sizes = [1, 256], strides = [1, 1]} : vector<8x256xf32> to vector<1x256xf32>
    %266 = vector.shape_cast %265 : vector<1x256xf32> to vector<1x256xf32>
    %267 = vector.broadcast %266 : vector<1x256xf32> to vector<8x256xf32>
    %268 = vector.extract_strided_slice %246 {offsets = [6, 0], sizes = [1, 256], strides = [1, 1]} : vector<8x256xf32> to vector<1x256xf32>
    %269 = vector.shape_cast %268 : vector<1x256xf32> to vector<1x256xf32>
    %270 = vector.broadcast %269 : vector<1x256xf32> to vector<8x256xf32>
    %c4_i32_16 = arith.constant 4 : i32
    %271 = vector.broadcast %c4_i32_16 : i32 to vector<8x256xi32>
    %272 = arith.cmpi sge, %17, %271 : vector<8x256xi32>
    %273 = arith.select %272, %270, %267 : vector<8x256xi1>, vector<8x256xf32>
    %274 = vector.extract_strided_slice %246 {offsets = [3, 0], sizes = [1, 256], strides = [1, 1]} : vector<8x256xf32> to vector<1x256xf32>
    %275 = vector.shape_cast %274 : vector<1x256xf32> to vector<1x256xf32>
    %276 = vector.broadcast %275 : vector<1x256xf32> to vector<8x256xf32>
    %277 = vector.extract_strided_slice %246 {offsets = [7, 0], sizes = [1, 256], strides = [1, 1]} : vector<8x256xf32> to vector<1x256xf32>
    %278 = vector.shape_cast %277 : vector<1x256xf32> to vector<1x256xf32>
    %279 = vector.broadcast %278 : vector<1x256xf32> to vector<8x256xf32>
    %c4_i32_17 = arith.constant 4 : i32
    %280 = vector.broadcast %c4_i32_17 : i32 to vector<8x256xi32>
    %281 = arith.cmpi sge, %17, %280 : vector<8x256xi32>
    %282 = arith.select %281, %279, %276 : vector<8x256xi1>, vector<8x256xf32>
    %283 = vector.extract_strided_slice %3 {offsets = [0, 0], sizes = [8, 1], strides = [1, 1]} : vector<8x36xf32> to vector<8x1xf32>
    %284 = vector.broadcast %283 : vector<8x1xf32> to vector<8x256xf32>
    %285 = arith.mulf %255, %284 : vector<8x256xf32>
    %286 = vector.extract_strided_slice %3 {offsets = [0, 1], sizes = [8, 1], strides = [1, 1]} : vector<8x36xf32> to vector<8x1xf32>
    %287 = vector.broadcast %286 : vector<8x1xf32> to vector<8x256xf32>
    %288 = arith.mulf %264, %287 : vector<8x256xf32>
    %289 = arith.addf %285, %288 : vector<8x256xf32>
    %290 = vector.extract_strided_slice %3 {offsets = [0, 2], sizes = [8, 1], strides = [1, 1]} : vector<8x36xf32> to vector<8x1xf32>
    %291 = vector.broadcast %290 : vector<8x1xf32> to vector<8x256xf32>
    %292 = arith.mulf %273, %291 : vector<8x256xf32>
    %293 = arith.addf %289, %292 : vector<8x256xf32>
    %294 = vector.extract_strided_slice %3 {offsets = [0, 3], sizes = [8, 1], strides = [1, 1]} : vector<8x36xf32> to vector<8x1xf32>
    %295 = vector.broadcast %294 : vector<8x1xf32> to vector<8x256xf32>
    %296 = arith.mulf %282, %295 : vector<8x256xf32>
    %297 = arith.addf %293, %296 : vector<8x256xf32>
    %298 = vector.extract_strided_slice %297 {offsets = [0, 239], sizes = [8, 17], strides = [1, 1]} : vector<8x256xf32> to vector<8x17xf32>
    %299 = vector.extract_strided_slice %297 {offsets = [0, 0], sizes = [8, 239], strides = [1, 1]} : vector<8x256xf32> to vector<8x239xf32>
    %300 = tpu.concatenate %298, %299 in 1 : vector<8x17xf32>, vector<8x239xf32> -> vector<8x256xf32>
    %301 = arith.andi %14, %10 : vector<8x256xi1>
    %cst_18 = arith.constant 0.000000e+00 : f32
    %302 = vector.broadcast %cst_18 : f32 to vector<8x256xf32>
    %303 = arith.select %301, %300, %302 : vector<8x256xi1>, vector<8x256xf32>
    %304 = vector.extract_strided_slice %3 {offsets = [0, 4], sizes = [8, 1], strides = [1, 1]} : vector<8x36xf32> to vector<8x1xf32>
    %305 = vector.broadcast %304 : vector<8x1xf32> to vector<8x256xf32>
    %306 = arith.mulf %255, %305 : vector<8x256xf32>
    %307 = vector.extract_strided_slice %3 {offsets = [0, 5], sizes = [8, 1], strides = [1, 1]} : vector<8x36xf32> to vector<8x1xf32>
    %308 = vector.broadcast %307 : vector<8x1xf32> to vector<8x256xf32>
    %309 = arith.mulf %264, %308 : vector<8x256xf32>
    %310 = arith.addf %306, %309 : vector<8x256xf32>
    %311 = vector.extract_strided_slice %3 {offsets = [0, 6], sizes = [8, 1], strides = [1, 1]} : vector<8x36xf32> to vector<8x1xf32>
    %312 = vector.broadcast %311 : vector<8x1xf32> to vector<8x256xf32>
    %313 = arith.mulf %273, %312 : vector<8x256xf32>
    %314 = arith.addf %310, %313 : vector<8x256xf32>
    %315 = vector.extract_strided_slice %3 {offsets = [0, 7], sizes = [8, 1], strides = [1, 1]} : vector<8x36xf32> to vector<8x1xf32>
    %316 = vector.broadcast %315 : vector<8x1xf32> to vector<8x256xf32>
    %317 = arith.mulf %282, %316 : vector<8x256xf32>
    %318 = arith.addf %314, %317 : vector<8x256xf32>
    %319 = vector.extract_strided_slice %318 {offsets = [0, 240], sizes = [8, 16], strides = [1, 1]} : vector<8x256xf32> to vector<8x16xf32>
    %320 = vector.extract_strided_slice %318 {offsets = [0, 0], sizes = [8, 240], strides = [1, 1]} : vector<8x256xf32> to vector<8x240xf32>
    %321 = tpu.concatenate %319, %320 in 1 : vector<8x16xf32>, vector<8x240xf32> -> vector<8x256xf32>
    %cst_19 = arith.constant 0.000000e+00 : f32
    %322 = vector.broadcast %cst_19 : f32 to vector<8x256xf32>
    %323 = arith.select %14, %321, %322 : vector<8x256xi1>, vector<8x256xf32>
    %324 = arith.addf %303, %323 : vector<8x256xf32>
    %325 = vector.extract_strided_slice %3 {offsets = [0, 8], sizes = [8, 1], strides = [1, 1]} : vector<8x36xf32> to vector<8x1xf32>
    %326 = vector.broadcast %325 : vector<8x1xf32> to vector<8x256xf32>
    %327 = arith.mulf %255, %326 : vector<8x256xf32>
    %328 = vector.extract_strided_slice %3 {offsets = [0, 9], sizes = [8, 1], strides = [1, 1]} : vector<8x36xf32> to vector<8x1xf32>
    %329 = vector.broadcast %328 : vector<8x1xf32> to vector<8x256xf32>
    %330 = arith.mulf %264, %329 : vector<8x256xf32>
    %331 = arith.addf %327, %330 : vector<8x256xf32>
    %332 = vector.extract_strided_slice %3 {offsets = [0, 10], sizes = [8, 1], strides = [1, 1]} : vector<8x36xf32> to vector<8x1xf32>
    %333 = vector.broadcast %332 : vector<8x1xf32> to vector<8x256xf32>
    %334 = arith.mulf %273, %333 : vector<8x256xf32>
    %335 = arith.addf %331, %334 : vector<8x256xf32>
    %336 = vector.extract_strided_slice %3 {offsets = [0, 11], sizes = [8, 1], strides = [1, 1]} : vector<8x36xf32> to vector<8x1xf32>
    %337 = vector.broadcast %336 : vector<8x1xf32> to vector<8x256xf32>
    %338 = arith.mulf %282, %337 : vector<8x256xf32>
    %339 = arith.addf %335, %338 : vector<8x256xf32>
    %340 = vector.extract_strided_slice %339 {offsets = [0, 241], sizes = [8, 15], strides = [1, 1]} : vector<8x256xf32> to vector<8x15xf32>
    %341 = vector.extract_strided_slice %339 {offsets = [0, 0], sizes = [8, 241], strides = [1, 1]} : vector<8x256xf32> to vector<8x241xf32>
    %342 = tpu.concatenate %340, %341 in 1 : vector<8x15xf32>, vector<8x241xf32> -> vector<8x256xf32>
    %343 = arith.andi %14, %12 : vector<8x256xi1>
    %cst_20 = arith.constant 0.000000e+00 : f32
    %344 = vector.broadcast %cst_20 : f32 to vector<8x256xf32>
    %345 = arith.select %343, %342, %344 : vector<8x256xi1>, vector<8x256xf32>
    %346 = arith.addf %324, %345 : vector<8x256xf32>
    %347 = vector.extract_strided_slice %3 {offsets = [0, 12], sizes = [8, 1], strides = [1, 1]} : vector<8x36xf32> to vector<8x1xf32>
    %348 = vector.broadcast %347 : vector<8x1xf32> to vector<8x256xf32>
    %349 = arith.mulf %255, %348 : vector<8x256xf32>
    %350 = vector.extract_strided_slice %3 {offsets = [0, 13], sizes = [8, 1], strides = [1, 1]} : vector<8x36xf32> to vector<8x1xf32>
    %351 = vector.broadcast %350 : vector<8x1xf32> to vector<8x256xf32>
    %352 = arith.mulf %264, %351 : vector<8x256xf32>
    %353 = arith.addf %349, %352 : vector<8x256xf32>
    %354 = vector.extract_strided_slice %3 {offsets = [0, 14], sizes = [8, 1], strides = [1, 1]} : vector<8x36xf32> to vector<8x1xf32>
    %355 = vector.broadcast %354 : vector<8x1xf32> to vector<8x256xf32>
    %356 = arith.mulf %273, %355 : vector<8x256xf32>
    %357 = arith.addf %353, %356 : vector<8x256xf32>
    %358 = vector.extract_strided_slice %3 {offsets = [0, 15], sizes = [8, 1], strides = [1, 1]} : vector<8x36xf32> to vector<8x1xf32>
    %359 = vector.broadcast %358 : vector<8x1xf32> to vector<8x256xf32>
    %360 = arith.mulf %282, %359 : vector<8x256xf32>
    %361 = arith.addf %357, %360 : vector<8x256xf32>
    %362 = vector.extract_strided_slice %361 {offsets = [0, 255], sizes = [8, 1], strides = [1, 1]} : vector<8x256xf32> to vector<8x1xf32>
    %363 = vector.extract_strided_slice %361 {offsets = [0, 0], sizes = [8, 255], strides = [1, 1]} : vector<8x256xf32> to vector<8x255xf32>
    %364 = tpu.concatenate %362, %363 in 1 : vector<8x1xf32>, vector<8x255xf32> -> vector<8x256xf32>
    %cst_21 = arith.constant 0.000000e+00 : f32
    %365 = vector.broadcast %cst_21 : f32 to vector<8x256xf32>
    %366 = arith.select %10, %364, %365 : vector<8x256xi1>, vector<8x256xf32>
    %367 = arith.addf %346, %366 : vector<8x256xf32>
    %368 = vector.extract_strided_slice %3 {offsets = [0, 16], sizes = [8, 1], strides = [1, 1]} : vector<8x36xf32> to vector<8x1xf32>
    %369 = vector.broadcast %368 : vector<8x1xf32> to vector<8x256xf32>
    %370 = arith.mulf %255, %369 : vector<8x256xf32>
    %371 = vector.extract_strided_slice %3 {offsets = [0, 17], sizes = [8, 1], strides = [1, 1]} : vector<8x36xf32> to vector<8x1xf32>
    %372 = vector.broadcast %371 : vector<8x1xf32> to vector<8x256xf32>
    %373 = arith.mulf %264, %372 : vector<8x256xf32>
    %374 = arith.addf %370, %373 : vector<8x256xf32>
    %375 = vector.extract_strided_slice %3 {offsets = [0, 18], sizes = [8, 1], strides = [1, 1]} : vector<8x36xf32> to vector<8x1xf32>
    %376 = vector.broadcast %375 : vector<8x1xf32> to vector<8x256xf32>
    %377 = arith.mulf %273, %376 : vector<8x256xf32>
    %378 = arith.addf %374, %377 : vector<8x256xf32>
    %379 = vector.extract_strided_slice %3 {offsets = [0, 19], sizes = [8, 1], strides = [1, 1]} : vector<8x36xf32> to vector<8x1xf32>
    %380 = vector.broadcast %379 : vector<8x1xf32> to vector<8x256xf32>
    %381 = arith.mulf %282, %380 : vector<8x256xf32>
    %382 = arith.addf %378, %381 : vector<8x256xf32>
    %383 = arith.addf %367, %382 : vector<8x256xf32>
    %384 = vector.extract_strided_slice %3 {offsets = [0, 20], sizes = [8, 1], strides = [1, 1]} : vector<8x36xf32> to vector<8x1xf32>
    %385 = vector.broadcast %384 : vector<8x1xf32> to vector<8x256xf32>
    %386 = arith.mulf %255, %385 : vector<8x256xf32>
    %387 = vector.extract_strided_slice %3 {offsets = [0, 21], sizes = [8, 1], strides = [1, 1]} : vector<8x36xf32> to vector<8x1xf32>
    %388 = vector.broadcast %387 : vector<8x1xf32> to vector<8x256xf32>
    %389 = arith.mulf %264, %388 : vector<8x256xf32>
    %390 = arith.addf %386, %389 : vector<8x256xf32>
    %391 = vector.extract_strided_slice %3 {offsets = [0, 22], sizes = [8, 1], strides = [1, 1]} : vector<8x36xf32> to vector<8x1xf32>
    %392 = vector.broadcast %391 : vector<8x1xf32> to vector<8x256xf32>
    %393 = arith.mulf %273, %392 : vector<8x256xf32>
    %394 = arith.addf %390, %393 : vector<8x256xf32>
    %395 = vector.extract_strided_slice %3 {offsets = [0, 23], sizes = [8, 1], strides = [1, 1]} : vector<8x36xf32> to vector<8x1xf32>
    %396 = vector.broadcast %395 : vector<8x1xf32> to vector<8x256xf32>
    %397 = arith.mulf %282, %396 : vector<8x256xf32>
    %398 = arith.addf %394, %397 : vector<8x256xf32>
    %399 = vector.extract_strided_slice %398 {offsets = [0, 1], sizes = [8, 255], strides = [1, 1]} : vector<8x256xf32> to vector<8x255xf32>
    %400 = vector.extract_strided_slice %398 {offsets = [0, 0], sizes = [8, 1], strides = [1, 1]} : vector<8x256xf32> to vector<8x1xf32>
    %401 = tpu.concatenate %399, %400 in 1 : vector<8x255xf32>, vector<8x1xf32> -> vector<8x256xf32>
    %cst_22 = arith.constant 0.000000e+00 : f32
    %402 = vector.broadcast %cst_22 : f32 to vector<8x256xf32>
    %403 = arith.select %12, %401, %402 : vector<8x256xi1>, vector<8x256xf32>
    %404 = arith.addf %383, %403 : vector<8x256xf32>
    %405 = vector.extract_strided_slice %3 {offsets = [0, 24], sizes = [8, 1], strides = [1, 1]} : vector<8x36xf32> to vector<8x1xf32>
    %406 = vector.broadcast %405 : vector<8x1xf32> to vector<8x256xf32>
    %407 = arith.mulf %255, %406 : vector<8x256xf32>
    %408 = vector.extract_strided_slice %3 {offsets = [0, 25], sizes = [8, 1], strides = [1, 1]} : vector<8x36xf32> to vector<8x1xf32>
    %409 = vector.broadcast %408 : vector<8x1xf32> to vector<8x256xf32>
    %410 = arith.mulf %264, %409 : vector<8x256xf32>
    %411 = arith.addf %407, %410 : vector<8x256xf32>
    %412 = vector.extract_strided_slice %3 {offsets = [0, 26], sizes = [8, 1], strides = [1, 1]} : vector<8x36xf32> to vector<8x1xf32>
    %413 = vector.broadcast %412 : vector<8x1xf32> to vector<8x256xf32>
    %414 = arith.mulf %273, %413 : vector<8x256xf32>
    %415 = arith.addf %411, %414 : vector<8x256xf32>
    %416 = vector.extract_strided_slice %3 {offsets = [0, 27], sizes = [8, 1], strides = [1, 1]} : vector<8x36xf32> to vector<8x1xf32>
    %417 = vector.broadcast %416 : vector<8x1xf32> to vector<8x256xf32>
    %418 = arith.mulf %282, %417 : vector<8x256xf32>
    %419 = arith.addf %415, %418 : vector<8x256xf32>
    %420 = vector.extract_strided_slice %419 {offsets = [0, 15], sizes = [8, 241], strides = [1, 1]} : vector<8x256xf32> to vector<8x241xf32>
    %421 = vector.extract_strided_slice %419 {offsets = [0, 0], sizes = [8, 15], strides = [1, 1]} : vector<8x256xf32> to vector<8x15xf32>
    %422 = tpu.concatenate %420, %421 in 1 : vector<8x241xf32>, vector<8x15xf32> -> vector<8x256xf32>
    %423 = arith.andi %16, %10 : vector<8x256xi1>
    %cst_23 = arith.constant 0.000000e+00 : f32
    %424 = vector.broadcast %cst_23 : f32 to vector<8x256xf32>
    %425 = arith.select %423, %422, %424 : vector<8x256xi1>, vector<8x256xf32>
    %426 = arith.addf %404, %425 : vector<8x256xf32>
    %427 = vector.extract_strided_slice %3 {offsets = [0, 28], sizes = [8, 1], strides = [1, 1]} : vector<8x36xf32> to vector<8x1xf32>
    %428 = vector.broadcast %427 : vector<8x1xf32> to vector<8x256xf32>
    %429 = arith.mulf %255, %428 : vector<8x256xf32>
    %430 = vector.extract_strided_slice %3 {offsets = [0, 29], sizes = [8, 1], strides = [1, 1]} : vector<8x36xf32> to vector<8x1xf32>
    %431 = vector.broadcast %430 : vector<8x1xf32> to vector<8x256xf32>
    %432 = arith.mulf %264, %431 : vector<8x256xf32>
    %433 = arith.addf %429, %432 : vector<8x256xf32>
    %434 = vector.extract_strided_slice %3 {offsets = [0, 30], sizes = [8, 1], strides = [1, 1]} : vector<8x36xf32> to vector<8x1xf32>
    %435 = vector.broadcast %434 : vector<8x1xf32> to vector<8x256xf32>
    %436 = arith.mulf %273, %435 : vector<8x256xf32>
    %437 = arith.addf %433, %436 : vector<8x256xf32>
    %438 = vector.extract_strided_slice %3 {offsets = [0, 31], sizes = [8, 1], strides = [1, 1]} : vector<8x36xf32> to vector<8x1xf32>
    %439 = vector.broadcast %438 : vector<8x1xf32> to vector<8x256xf32>
    %440 = arith.mulf %282, %439 : vector<8x256xf32>
    %441 = arith.addf %437, %440 : vector<8x256xf32>
    %442 = vector.extract_strided_slice %441 {offsets = [0, 16], sizes = [8, 240], strides = [1, 1]} : vector<8x256xf32> to vector<8x240xf32>
    %443 = vector.extract_strided_slice %441 {offsets = [0, 0], sizes = [8, 16], strides = [1, 1]} : vector<8x256xf32> to vector<8x16xf32>
    %444 = tpu.concatenate %442, %443 in 1 : vector<8x240xf32>, vector<8x16xf32> -> vector<8x256xf32>
    %cst_24 = arith.constant 0.000000e+00 : f32
    %445 = vector.broadcast %cst_24 : f32 to vector<8x256xf32>
    %446 = arith.select %16, %444, %445 : vector<8x256xi1>, vector<8x256xf32>
    %447 = arith.addf %426, %446 : vector<8x256xf32>
    %448 = vector.extract_strided_slice %3 {offsets = [0, 32], sizes = [8, 1], strides = [1, 1]} : vector<8x36xf32> to vector<8x1xf32>
    %449 = vector.broadcast %448 : vector<8x1xf32> to vector<8x256xf32>
    %450 = arith.mulf %255, %449 : vector<8x256xf32>
    %451 = vector.extract_strided_slice %3 {offsets = [0, 33], sizes = [8, 1], strides = [1, 1]} : vector<8x36xf32> to vector<8x1xf32>
    %452 = vector.broadcast %451 : vector<8x1xf32> to vector<8x256xf32>
    %453 = arith.mulf %264, %452 : vector<8x256xf32>
    %454 = arith.addf %450, %453 : vector<8x256xf32>
    %455 = vector.extract_strided_slice %3 {offsets = [0, 34], sizes = [8, 1], strides = [1, 1]} : vector<8x36xf32> to vector<8x1xf32>
    %456 = vector.broadcast %455 : vector<8x1xf32> to vector<8x256xf32>
    %457 = arith.mulf %273, %456 : vector<8x256xf32>
    %458 = arith.addf %454, %457 : vector<8x256xf32>
    %459 = vector.extract_strided_slice %3 {offsets = [0, 35], sizes = [8, 1], strides = [1, 1]} : vector<8x36xf32> to vector<8x1xf32>
    %460 = vector.broadcast %459 : vector<8x1xf32> to vector<8x256xf32>
    %461 = arith.mulf %282, %460 : vector<8x256xf32>
    %462 = arith.addf %458, %461 : vector<8x256xf32>
    %463 = vector.extract_strided_slice %462 {offsets = [0, 17], sizes = [8, 239], strides = [1, 1]} : vector<8x256xf32> to vector<8x239xf32>
    %464 = vector.extract_strided_slice %462 {offsets = [0, 0], sizes = [8, 17], strides = [1, 1]} : vector<8x256xf32> to vector<8x17xf32>
    %465 = tpu.concatenate %463, %464 in 1 : vector<8x239xf32>, vector<8x17xf32> -> vector<8x256xf32>
    %466 = arith.andi %16, %12 : vector<8x256xi1>
    %cst_25 = arith.constant 0.000000e+00 : f32
    %467 = vector.broadcast %cst_25 : f32 to vector<8x256xf32>
    %468 = arith.select %466, %465, %467 : vector<8x256xi1>, vector<8x256xf32>
    %469 = arith.addf %447, %468 : vector<8x256xf32>
    %470 = arith.addf %0, %469 : vector<8x256xf32>
    %471 = vector.broadcast %5 : vector<8x1xf32> to vector<8x256xf32>
    %472 = arith.subf %470, %471 : vector<8x256xf32>
    %cst_26 = arith.constant 0.000000e+00 : f32
    %473 = vector.broadcast %cst_26 : f32 to vector<8x256xf32>
    %474 = arith.maximumf %472, %473 : vector<8x256xf32>
    %475 = vector.broadcast %5 : vector<8x1xf32> to vector<8x256xf32>
    %476 = arith.addf %474, %475 : vector<8x256xf32>
    %c0_27 = arith.constant 0 : index
    %c0_28 = arith.constant 0 : index
    %477 = vector.load %arg3[%c0_27, %c0_28] : memref<8x256xf32, #tpu.memory_space<vmem>>, vector<8x256xf32>
    tpu.vector_store %arg3[%c0_27, %c0_28], %476 {strides = array<i32>} : memref<8x256xf32, #tpu.memory_space<vmem>>, vector<8x256xf32>,
    return
  }
  func.func @transform_0(%arg0: i32) -> (i32, i32) {
    %c0_i32 = arith.constant 0 : i32
    %c0_i32_0 = arith.constant 0 : i32
    return %arg0, %c0_i32 : i32, i32
  }
  func.func @transform_1(%arg0: i32) -> (i32, i32) {
    %c0_i32 = arith.constant 0 : i32
    %c0_i32_0 = arith.constant 0 : i32
    %c0_i32_1 = arith.constant 0 : i32
    return %c0_i32, %c0_i32_0 : i32, i32
  }
  func.func @transform_2(%arg0: i32) -> (i32, i32) {
    %c0_i32 = arith.constant 0 : i32
    %c0_i32_0 = arith.constant 0 : i32
    return %arg0, %c0_i32 : i32, i32
  }
}

</mosaic_0001>

<llo_original>
// kernel: resblock_forward.1
$region0: #{resblock_forward.1}
  #allocation0 [shape = 'u32[]', space=smem, size = 0x4, offset = 0x4, fixed_abs, tag = 'smem constant byte address 0x4 - core index']
  #allocation1 [shape = 'u32[72,128]{1,0:T(1,128)}', space=vmem, size = 0x9000, scoped, tag = 'internal scratch']
  %s0 = inlined_call_operand.vmem [shape: f32[8,256], index: 0, kind: input, shape index: {}]
  %s1 = inlined_call_operand.vmem [shape: f32[8,74], index: 1, kind: input, shape index: {}]
  %s2 = inlined_call_operand.vmem [shape: f32[8,256], index: 2, kind: output, shape index: {}]
  %s3 = sld [smem:[#allocation0]]
  $region18: #{resblock_forward.1} parent=0
    _
  %s5 = ssub.s32 1, %s3
  %s6 = scalar_select 0, %s5, %s3
  // Predicated region
  $region2: #{resblock_forward.1} parent=0 // pred_check
    _
  $region3: #{resblock_forward.1} parent=0 // pred_check_branch
    %8 = sbr.rel (0) target = $region5
  $region4: #{resblock_forward.1} parent=0 // pred_region
    _
  $region5: #{resblock_forward.1} parent=0 // pred_fallthru
    _
  // Predicated region
  $region6: #{resblock_forward.1} parent=0 // pred_check
    _
  $region7: #{resblock_forward.1} parent=0 // pred_check_branch
    %10 = sbr.rel (0) target = $region9
  $region8: #{resblock_forward.1} parent=0 // pred_region
    _
  $region9: #{resblock_forward.1} parent=0 // pred_fallthru
    _
  %v11 = vld [vmem:[%s0] sm:$0xff]
  %v12 = vld [vmem:[%s0 + $0x8] sm:$0xff]
  %v13 = vld [vmem:[%s1] sm:$0xff]
  %v14 = vlaneseq
  %v15 = vand.u32 %v14, 127
  %v16 = vadd.s32 %v15, 128
  %v17 = vand.u32 %v15, 15
  %v18 = vand.u32 %v16, 15
  %vm19 = vcmp.ge.s32.totalorder %v17, 1
  %vm20 = vcmp.ge.s32.totalorder %v18, 1
  %vm21 = vcmp.le.s32.totalorder %v17, 14
  %vm22 = vcmp.le.s32.totalorder %v18, 14
  %vm23 = vcmp.ge.s32.totalorder %v15, 16
  %vm24 = vcmp.ge.s32.totalorder %v16, 16
  %vm25 = vcmp.lt.s32.totalorder %v15, 240
  %vm26 = vcmp.lt.s32.totalorder %v16, 240
  %v27 = vlaneseq
  %v28 = vshrl.u32 %v27, 7
  %v29 = vperm.slane %v11, 0
  %v30 = vperm.slane %v12, 0
  %v31 = vperm.slane %v11, 4
  %v32 = vperm.slane %v12, 4
  %vm33 = vcmp.ge.s32.totalorder %v28, 4
  %v34 = vsel %vm33, %v31, %v29
  %v35 = vsel %vm33, %v32, %v30
  %v36 = vperm.slane %v11, 1
  %v37 = vperm.slane %v12, 1
  %v38 = vperm.slane %v11, 5
  %v39 = vperm.slane %v12, 5
  %v40 = vsel %vm33, %v38, %v36
  %v41 = vsel %vm33, %v39, %v37
  %v42 = vperm.slane %v11, 2
  %v43 = vperm.slane %v12, 2
  %v44 = vperm.slane %v11, 6
  %v45 = vperm.slane %v12, 6
  %v46 = vsel %vm33, %v44, %v42
  %v47 = vsel %vm33, %v45, %v43
  %v48 = vperm.slane %v11, 3
  %v49 = vperm.slane %v12, 3
  %v50 = vperm.slane %v11, 7
  %v51 = vperm.slane %v12, 7
  %v52 = vsel %vm33, %v50, %v48
  %v53 = vsel %vm33, %v51, %v49
  %55 = vset.pattern.permute.xlu0 0
  %56 = vperm.xlu0 %55, %v13
  %v57 = vpop.permute.xlu0 %56
  %v59 = vmul.f32 %v34, %v57
  %v60 = vmul.f32 %v35, %v57
  %61 = vset.pattern.permute.xlu0 1
  %62 = vperm.xlu0 %61, %v13
  %v63 = vpop.permute.xlu0 %62
  %v65 = vmul.f32 %v40, %v63
  %v66 = vmul.f32 %v41, %v63
  %v67 = vadd.f32 %v59, %v65
  %v68 = vadd.f32 %v60, %v66
  %69 = vset.pattern.permute.xlu0 2
  %70 = vperm.xlu0 %69, %v13
  %v71 = vpop.permute.xlu0 %70
  %v73 = vmul.f32 %v46, %v71
  %v74 = vmul.f32 %v47, %v71
  %v75 = vadd.f32 %v67, %v73
  %v76 = vadd.f32 %v68, %v74
  %77 = vset.pattern.permute.xlu0 3
  %78 = vperm.xlu0 %77, %v13
  %v79 = vpop.permute.xlu0 %78
  %v81 = vmul.f32 %v52, %v79
  %v82 = vmul.f32 %v53, %v79
  %v83 = vadd.f32 %v75, %v81
  %v84 = vadd.f32 %v76, %v82
  %86 = vrot.lane.b32.xlu0 %v84, 17
  %v87 = vpop.permute.xlu0 %86
  %90 = vrot.lane.b32.xlu0 %v83, 17
  %v91 = vpop.permute.xlu0 %90
  %vm92 = vcmask 138240
  %v93 = vsel %vm92, %v91, %v87
  %v96 = vsel %vm92, %v87, %v91
  %vm97 = vmand %vm23, %vm19
  %vm98 = vmand %vm24, %vm20
  %v99 = vsel %vm97, %v96, 0.0
  %v100 = vsel %vm98, %v93, 0.0
  %101 = vset.pattern.permute.xlu0 4
  %102 = vperm.xlu0 %101, %v13
  %v103 = vpop.permute.xlu0 %102
  %v105 = vmul.f32 %v34, %v103
  %v106 = vmul.f32 %v35, %v103
  %107 = vset.pattern.permute.xlu0 5
  %108 = vperm.xlu0 %107, %v13
  %v109 = vpop.permute.xlu0 %108
  %v111 = vmul.f32 %v40, %v109
  %v112 = vmul.f32 %v41, %v109
  %v113 = vadd.f32 %v105, %v111
  %v114 = vadd.f32 %v106, %v112
  %115 = vset.pattern.permute.xlu0 6
  %116 = vperm.xlu0 %115, %v13
  %v117 = vpop.permute.xlu0 %116
  %v119 = vmul.f32 %v46, %v117
  %v120 = vmul.f32 %v47, %v117
  %v121 = vadd.f32 %v113, %v119
  %v122 = vadd.f32 %v114, %v120
  %123 = vset.pattern.permute.xlu0 7
  %124 = vperm.xlu0 %123, %v13
  %v125 = vpop.permute.xlu0 %124
  %v127 = vmul.f32 %v52, %v125
  %v128 = vmul.f32 %v53, %v125
  %v129 = vadd.f32 %v121, %v127
  %v130 = vadd.f32 %v122, %v128
  %132 = vrot.lane.b32.xlu0 %v130, 16
  %v133 = vpop.permute.xlu0 %132
  %136 = vrot.lane.b32.xlu0 %v129, 16
  %v137 = vpop.permute.xlu0 %136
  %vm138 = vcmask 130048
  %v139 = vsel %vm138, %v137, %v133
  %v142 = vsel %vm138, %v133, %v137
  %v143 = vsel %vm23, %v142, 0.0
  %v144 = vsel %vm24, %v139, 0.0
  %v145 = vadd.f32 %v99, %v143
  %v146 = vadd.f32 %v100, %v144
  %147 = vset.pattern.permute.xlu0 8
  %148 = vperm.xlu0 %147, %v13
  %v149 = vpop.permute.xlu0 %148
  %v151 = vmul.f32 %v34, %v149
  %v152 = vmul.f32 %v35, %v149
  %153 = vset.pattern.permute.xlu0 9
  %154 = vperm.xlu0 %153, %v13
  %v155 = vpop.permute.xlu0 %154
  %v157 = vmul.f32 %v40, %v155
  %v158 = vmul.f32 %v41, %v155
  %v159 = vadd.f32 %v151, %v157
  %v160 = vadd.f32 %v152, %v158
  %161 = vset.pattern.permute.xlu0 10
  %162 = vperm.xlu0 %161, %v13
  %v163 = vpop.permute.xlu0 %162
  %v165 = vmul.f32 %v46, %v163
  %v166 = vmul.f32 %v47, %v163
  %v167 = vadd.f32 %v159, %v165
  %v168 = vadd.f32 %v160, %v166
  %169 = vset.pattern.permute.xlu0 11
  %170 = vperm.xlu0 %169, %v13
  %v171 = vpop.permute.xlu0 %170
  %v173 = vmul.f32 %v52, %v171
  %v174 = vmul.f32 %v53, %v171
  %v175 = vadd.f32 %v167, %v173
  %v176 = vadd.f32 %v168, %v174
  %178 = vrot.lane.b32.xlu0 %v176, 15
  %v179 = vpop.permute.xlu0 %178
  %182 = vrot.lane.b32.xlu0 %v175, 15
  %v183 = vpop.permute.xlu0 %182
  %vm184 = vcmask 121856
  %v185 = vsel %vm184, %v183, %v179
  %v188 = vsel %vm184, %v179, %v183
  %vm189 = vmand %vm23, %vm21
  %vm190 = vmand %vm24, %vm22
  %v191 = vsel %vm189, %v188, 0.0
  %v192 = vsel %vm190, %v185, 0.0
  %v193 = vadd.f32 %v145, %v191
  %v194 = vadd.f32 %v146, %v192
  %195 = vset.pattern.permute.xlu0 12
  %196 = vperm.xlu0 %195, %v13
  %v197 = vpop.permute.xlu0 %196
  %v199 = vmul.f32 %v34, %v197
  %v200 = vmul.f32 %v35, %v197
  %201 = vset.pattern.permute.xlu0 13
  %202 = vperm.xlu0 %201, %v13
  %v203 = vpop.permute.xlu0 %202
  %v205 = vmul.f32 %v40, %v203
  %v206 = vmul.f32 %v41, %v203
  %v207 = vadd.f32 %v199, %v205
  %v208 = vadd.f32 %v200, %v206
  %209 = vset.pattern.permute.xlu0 14
  %210 = vperm.xlu0 %209, %v13
  %v211 = vpop.permute.xlu0 %210
  %v213 = vmul.f32 %v46, %v211
  %v214 = vmul.f32 %v47, %v211
  %v215 = vadd.f32 %v207, %v213
  %v216 = vadd.f32 %v208, %v214
  %217 = vset.pattern.permute.xlu0 15
  %218 = vperm.xlu0 %217, %v13
  %v219 = vpop.permute.xlu0 %218
  %v221 = vmul.f32 %v52, %v219
  %v222 = vmul.f32 %v53, %v219
  %v223 = vadd.f32 %v215, %v221
  %v224 = vadd.f32 %v216, %v222
  %226 = vrot.lane.b32.xlu0 %v224, 1
  %v227 = vpop.permute.xlu0 %226
  %230 = vrot.lane.b32.xlu0 %v223, 1
  %v231 = vpop.permute.xlu0 %230
  %vm232 = vcmask 7168
  %v233 = vsel %vm232, %v231, %v227
  %v236 = vsel %vm232, %v227, %v231
  %v237 = vsel %vm19, %v236, 0.0
  %v238 = vsel %vm20, %v233, 0.0
  %v239 = vadd.f32 %v193, %v237
  %v240 = vadd.f32 %v194, %v238
  %241 = vset.pattern.permute.xlu0 16
  %242 = vperm.xlu0 %241, %v13
  %v243 = vpop.permute.xlu0 %242
  %v245 = vmul.f32 %v34, %v243
  %v246 = vmul.f32 %v35, %v243
  %247 = vset.pattern.permute.xlu0 17
  %248 = vperm.xlu0 %247, %v13
  %v249 = vpop.permute.xlu0 %248
  %v251 = vmul.f32 %v40, %v249
  %v252 = vmul.f32 %v41, %v249
  %v253 = vadd.f32 %v245, %v251
  %v254 = vadd.f32 %v246, %v252
  %255 = vset.pattern.permute.xlu0 18
  %256 = vperm.xlu0 %255, %v13
  %v257 = vpop.permute.xlu0 %256
  %v259 = vmul.f32 %v46, %v257
  %v260 = vmul.f32 %v47, %v257
  %v261 = vadd.f32 %v253, %v259
  %v262 = vadd.f32 %v254, %v260
  %263 = vset.pattern.permute.xlu0 19
  %264 = vperm.xlu0 %263, %v13
  %v265 = vpop.permute.xlu0 %264
  %v267 = vmul.f32 %v52, %v265
  %v268 = vmul.f32 %v53, %v265
  %v269 = vadd.f32 %v261, %v267
  %v270 = vadd.f32 %v262, %v268
  %v271 = vadd.f32 %v239, %v269
  %v272 = vadd.f32 %v240, %v270
  %273 = vset.pattern.permute.xlu0 20
  %274 = vperm.xlu0 %273, %v13
  %v275 = vpop.permute.xlu0 %274
  %v277 = vmul.f32 %v34, %v275
  %v278 = vmul.f32 %v35, %v275
  %279 = vset.pattern.permute.xlu0 21
  %280 = vperm.xlu0 %279, %v13
  %v281 = vpop.permute.xlu0 %280
  %v283 = vmul.f32 %v40, %v281
  %v284 = vmul.f32 %v41, %v281
  %v285 = vadd.f32 %v277, %v283
  %v286 = vadd.f32 %v278, %v284
  %287 = vset.pattern.permute.xlu0 22
  %288 = vperm.xlu0 %287, %v13
  %v289 = vpop.permute.xlu0 %288
  %v291 = vmul.f32 %v46, %v289
  %v292 = vmul.f32 %v47, %v289
  %v293 = vadd.f32 %v285, %v291
  %v294 = vadd.f32 %v286, %v292
  %295 = vset.pattern.permute.xlu0 23
  %296 = vperm.xlu0 %295, %v13
  %v297 = vpop.permute.xlu0 %296
  %v299 = vmul.f32 %v52, %v297
  %v300 = vmul.f32 %v53, %v297
  %v301 = vadd.f32 %v293, %v299
  %v302 = vadd.f32 %v294, %v300
  %305 = vrot.lane.b32.xlu0 %v301, 127
  %v306 = vpop.permute.xlu0 %305
  %307 = vrot.lane.b32.xlu0 %v302, 127
  %v308 = vpop.permute.xlu0 %307
  %vm309 = vcmask 1039360
  %v310 = vsel %vm309, %v306, %v308
  %v314 = vsel %vm309, %v308, %v306
  %v315 = vsel %vm21, %v310, 0.0
  %v316 = vsel %vm22, %v314, 0.0
  %v317 = vadd.f32 %v271, %v315
  %v318 = vadd.f32 %v272, %v316
  %319 = vset.pattern.permute.xlu0 24
  %320 = vperm.xlu0 %319, %v13
  %v321 = vpop.permute.xlu0 %320
  %v323 = vmul.f32 %v34, %v321
  %v324 = vmul.f32 %v35, %v321
  %325 = vset.pattern.permute.xlu0 25
  %326 = vperm.xlu0 %325, %v13
  %v327 = vpop.permute.xlu0 %326
  %v329 = vmul.f32 %v40, %v327
  %v330 = vmul.f32 %v41, %v327
  %v331 = vadd.f32 %v323, %v329
  %v332 = vadd.f32 %v324, %v330
  %333 = vset.pattern.permute.xlu0 26
  %334 = vperm.xlu0 %333, %v13
  %v335 = vpop.permute.xlu0 %334
  %v337 = vmul.f32 %v46, %v335
  %v338 = vmul.f32 %v47, %v335
  %v339 = vadd.f32 %v331, %v337
  %v340 = vadd.f32 %v332, %v338
  %341 = vset.pattern.permute.xlu0 27
  %342 = vperm.xlu0 %341, %v13
  %v343 = vpop.permute.xlu0 %342
  %v345 = vmul.f32 %v52, %v343
  %v346 = vmul.f32 %v53, %v343
  %v347 = vadd.f32 %v339, %v345
  %v348 = vadd.f32 %v340, %v346
  %351 = vrot.lane.b32.xlu0 %v347, 113
  %v352 = vpop.permute.xlu0 %351
  %353 = vrot.lane.b32.xlu0 %v348, 113
  %v354 = vpop.permute.xlu0 %353
  %vm355 = vcmask 924672
  %v356 = vsel %vm355, %v352, %v354
  %v360 = vsel %vm355, %v354, %v352
  %vm361 = vmand %vm25, %vm19
  %vm362 = vmand %vm26, %vm20
  %v363 = vsel %vm361, %v356, 0.0
  %v364 = vsel %vm362, %v360, 0.0
  %v365 = vadd.f32 %v317, %v363
  %v366 = vadd.f32 %v318, %v364
  %367 = vset.pattern.permute.xlu0 28
  %368 = vperm.xlu0 %367, %v13
  %v369 = vpop.permute.xlu0 %368
  %v371 = vmul.f32 %v34, %v369
  %v372 = vmul.f32 %v35, %v369
  %373 = vset.pattern.permute.xlu0 29
  %374 = vperm.xlu0 %373, %v13
  %v375 = vpop.permute.xlu0 %374
  %v377 = vmul.f32 %v40, %v375
  %v378 = vmul.f32 %v41, %v375
  %v379 = vadd.f32 %v371, %v377
  %v380 = vadd.f32 %v372, %v378
  %381 = vset.pattern.permute.xlu0 30
  %382 = vperm.xlu0 %381, %v13
  %v383 = vpop.permute.xlu0 %382
  %v385 = vmul.f32 %v46, %v383
  %v386 = vmul.f32 %v47, %v383
  %v387 = vadd.f32 %v379, %v385
  %v388 = vadd.f32 %v380, %v386
  %389 = vset.pattern.permute.xlu0 31
  %390 = vperm.xlu0 %389, %v13
  %v391 = vpop.permute.xlu0 %390
  %v393 = vmul.f32 %v52, %v391
  %v394 = vmul.f32 %v53, %v391
  %v395 = vadd.f32 %v387, %v393
  %v396 = vadd.f32 %v388, %v394
  %399 = vrot.lane.b32.xlu0 %v395, 112
  %v400 = vpop.permute.xlu0 %399
  %401 = vrot.lane.b32.xlu0 %v396, 112
  %v402 = vpop.permute.xlu0 %401
  %vm403 = vcmask 916480
  %v404 = vsel %vm403, %v400, %v402
  %v408 = vsel %vm403, %v402, %v400
  %v409 = vsel %vm25, %v404, 0.0
  %v410 = vsel %vm26, %v408, 0.0
  %v411 = vadd.f32 %v365, %v409
  %v412 = vadd.f32 %v366, %v410
  %413 = vset.pattern.permute.xlu0 32
  %414 = vperm.xlu0 %413, %v13
  %v415 = vpop.permute.xlu0 %414
  %v417 = vmul.f32 %v34, %v415
  %v418 = vmul.f32 %v35, %v415
  %419 = vset.pattern.permute.xlu0 33
  %420 = vperm.xlu0 %419, %v13
  %v421 = vpop.permute.xlu0 %420
  %v423 = vmul.f32 %v40, %v421
  %v424 = vmul.f32 %v41, %v421
  %v425 = vadd.f32 %v417, %v423
  %v426 = vadd.f32 %v418, %v424
  %427 = vset.pattern.permute.xlu0 34
  %428 = vperm.xlu0 %427, %v13
  %v429 = vpop.permute.xlu0 %428
  %v431 = vmul.f32 %v46, %v429
  %v432 = vmul.f32 %v47, %v429
  %v433 = vadd.f32 %v425, %v431
  %v434 = vadd.f32 %v426, %v432
  %435 = vset.pattern.permute.xlu0 35
  %436 = vperm.xlu0 %435, %v13
  %v437 = vpop.permute.xlu0 %436
  %v439 = vmul.f32 %v52, %v437
  %v440 = vmul.f32 %v53, %v437
  %v441 = vadd.f32 %v433, %v439
  %v442 = vadd.f32 %v434, %v440
  %445 = vrot.lane.b32.xlu0 %v441, 111
  %v446 = vpop.permute.xlu0 %445
  %447 = vrot.lane.b32.xlu0 %v442, 111
  %v448 = vpop.permute.xlu0 %447
  %vm449 = vcmask 908288
  %v450 = vsel %vm449, %v446, %v448
  %v454 = vsel %vm449, %v448, %v446
  %vm455 = vmand %vm25, %vm21
  %vm456 = vmand %vm26, %vm22
  %v457 = vsel %vm455, %v450, 0.0
  %v458 = vsel %vm456, %v454, 0.0
  %v459 = vadd.f32 %v411, %v457
  %v460 = vadd.f32 %v412, %v458
  %461 = vset.pattern.permute.xlu0 72
  %462 = vperm.xlu0 %461, %v13
  %v463 = vpop.permute.xlu0 %462
  %v465 = vsub.f32 %v459, %v463
  %v466 = vsub.f32 %v460, %v463
  %v467 = vmax.f32 %v465, 0.0
  %v468 = vmax.f32 %v466, 0.0
  %v469 = vadd.f32 %v467, %v463
  %v470 = vadd.f32 %v468, %v463
  %v471 = vperm.slane %v469, 0
  %v472 = vperm.slane %v470, 0
  %v473 = vperm.slane %v469, 4
  %v474 = vperm.slane %v470, 4
  %v475 = vsel %vm33, %v473, %v471
  %v476 = vsel %vm33, %v474, %v472
  %v477 = vperm.slane %v469, 1
  %v478 = vperm.slane %v470, 1
  %v479 = vperm.slane %v469, 5
  %v480 = vperm.slane %v470, 5
  %v481 = vsel %vm33, %v479, %v477
  %v482 = vsel %vm33, %v480, %v478
  %v483 = vperm.slane %v469, 2
  %v484 = vperm.slane %v470, 2
  %v485 = vperm.slane %v469, 6
  %v486 = vperm.slane %v470, 6
  %v487 = vsel %vm33, %v485, %v483
  %v488 = vsel %vm33, %v486, %v484
  %v489 = vperm.slane %v469, 3
  %v490 = vperm.slane %v470, 3
  %v491 = vperm.slane %v469, 7
  %v492 = vperm.slane %v470, 7
  %v493 = vsel %vm33, %v491, %v489
  %v494 = vsel %vm33, %v492, %v490
  %495 = vset.pattern.permute.xlu0 36
  %496 = vperm.xlu0 %495, %v13
  %v497 = vpop.permute.xlu0 %496
  %v499 = vmul.f32 %v475, %v497
  %v500 = vmul.f32 %v476, %v497
  %501 = vset.pattern.permute.xlu0 37
  %502 = vperm.xlu0 %501, %v13
  %v503 = vpop.permute.xlu0 %502
  %v505 = vmul.f32 %v481, %v503
  %v506 = vmul.f32 %v482, %v503
  %v507 = vadd.f32 %v499, %v505
  %v508 = vadd.f32 %v500, %v506
  %509 = vset.pattern.permute.xlu0 38
  %510 = vperm.xlu0 %509, %v13
  %v511 = vpop.permute.xlu0 %510
  %v513 = vmul.f32 %v487, %v511
  %v514 = vmul.f32 %v488, %v511
  %v515 = vadd.f32 %v507, %v513
  %v516 = vadd.f32 %v508, %v514
  %517 = vset.pattern.permute.xlu0 39
  %518 = vperm.xlu0 %517, %v13
  %v519 = vpop.permute.xlu0 %518
  %v521 = vmul.f32 %v493, %v519
  %v522 = vmul.f32 %v494, %v519
  %v523 = vadd.f32 %v515, %v521
  %v524 = vadd.f32 %v516, %v522
  %526 = vrot.lane.b32.xlu0 %v524, 17
  %v527 = vpop.permute.xlu0 %526
  %530 = vrot.lane.b32.xlu0 %v523, 17
  %v531 = vpop.permute.xlu0 %530
  %v532 = vsel %vm92, %v531, %v527
  %v535 = vsel %vm92, %v527, %v531
  %v536 = vsel %vm97, %v535, 0.0
  %v537 = vsel %vm98, %v532, 0.0
  %538 = vset.pattern.permute.xlu0 40
  %539 = vperm.xlu0 %538, %v13
  %v540 = vpop.permute.xlu0 %539
  %v542 = vmul.f32 %v475, %v540
  %v543 = vmul.f32 %v476, %v540
  %544 = vset.pattern.permute.xlu0 41
  %545 = vperm.xlu0 %544, %v13
  %v546 = vpop.permute.xlu0 %545
  %v548 = vmul.f32 %v481, %v546
  %v549 = vmul.f32 %v482, %v546
  %v550 = vadd.f32 %v542, %v548
  %v551 = vadd.f32 %v543, %v549
  %552 = vset.pattern.permute.xlu0 42
  %553 = vperm.xlu0 %552, %v13
  %v554 = vpop.permute.xlu0 %553
  %v556 = vmul.f32 %v487, %v554
  %v557 = vmul.f32 %v488, %v554
  %v558 = vadd.f32 %v550, %v556
  %v559 = vadd.f32 %v551, %v557
  %560 = vset.pattern.permute.xlu0 43
  %561 = vperm.xlu0 %560, %v13
  %v562 = vpop.permute.xlu0 %561
  %v564 = vmul.f32 %v493, %v562
  %v565 = vmul.f32 %v494, %v562
  %v566 = vadd.f32 %v558, %v564
  %v567 = vadd.f32 %v559, %v565
  %569 = vrot.lane.b32.xlu0 %v567, 16
  %v570 = vpop.permute.xlu0 %569
  %573 = vrot.lane.b32.xlu0 %v566, 16
  %v574 = vpop.permute.xlu0 %573
  %v575 = vsel %vm138, %v574, %v570
  %v578 = vsel %vm138, %v570, %v574
  %v579 = vsel %vm23, %v578, 0.0
  %v580 = vsel %vm24, %v575, 0.0
  %v581 = vadd.f32 %v536, %v579
  %v582 = vadd.f32 %v537, %v580
  %583 = vset.pattern.permute.xlu0 44
  %584 = vperm.xlu0 %583, %v13
  %v585 = vpop.permute.xlu0 %584
  %v587 = vmul.f32 %v475, %v585
  %v588 = vmul.f32 %v476, %v585
  %589 = vset.pattern.permute.xlu0 45
  %590 = vperm.xlu0 %589, %v13
  %v591 = vpop.permute.xlu0 %590
  %v593 = vmul.f32 %v481, %v591
  %v594 = vmul.f32 %v482, %v591
  %v595 = vadd.f32 %v587, %v593
  %v596 = vadd.f32 %v588, %v594
  %597 = vset.pattern.permute.xlu0 46
  %598 = vperm.xlu0 %597, %v13
  %v599 = vpop.permute.xlu0 %598
  %v601 = vmul.f32 %v487, %v599
  %v602 = vmul.f32 %v488, %v599
  %v603 = vadd.f32 %v595, %v601
  %v604 = vadd.f32 %v596, %v602
  %605 = vset.pattern.permute.xlu0 47
  %606 = vperm.xlu0 %605, %v13
  %v607 = vpop.permute.xlu0 %606
  %v609 = vmul.f32 %v493, %v607
  %v610 = vmul.f32 %v494, %v607
  %v611 = vadd.f32 %v603, %v609
  %v612 = vadd.f32 %v604, %v610
  %614 = vrot.lane.b32.xlu0 %v612, 15
  %v615 = vpop.permute.xlu0 %614
  %618 = vrot.lane.b32.xlu0 %v611, 15
  %v619 = vpop.permute.xlu0 %618
  %v620 = vsel %vm184, %v619, %v615
  %v623 = vsel %vm184, %v615, %v619
  %v624 = vsel %vm189, %v623, 0.0
  %v625 = vsel %vm190, %v620, 0.0
  %v626 = vadd.f32 %v581, %v624
  %v627 = vadd.f32 %v582, %v625
  %628 = vset.pattern.permute.xlu0 48
  %629 = vperm.xlu0 %628, %v13
  %v630 = vpop.permute.xlu0 %629
  %v632 = vmul.f32 %v475, %v630
  %v633 = vmul.f32 %v476, %v630
  %634 = vset.pattern.permute.xlu0 49
  %635 = vperm.xlu0 %634, %v13
  %v636 = vpop.permute.xlu0 %635
  %v638 = vmul.f32 %v481, %v636
  %v639 = vmul.f32 %v482, %v636
  %v640 = vadd.f32 %v632, %v638
  %v641 = vadd.f32 %v633, %v639
  %642 = vset.pattern.permute.xlu0 50
  %643 = vperm.xlu0 %642, %v13
  %v644 = vpop.permute.xlu0 %643
  %v646 = vmul.f32 %v487, %v644
  %v647 = vmul.f32 %v488, %v644
  %v648 = vadd.f32 %v640, %v646
  %v649 = vadd.f32 %v641, %v647
  %650 = vset.pattern.permute.xlu0 51
  %651 = vperm.xlu0 %650, %v13
  %v652 = vpop.permute.xlu0 %651
  %v654 = vmul.f32 %v493, %v652
  %v655 = vmul.f32 %v494, %v652
  %v656 = vadd.f32 %v648, %v654
  %v657 = vadd.f32 %v649, %v655
  %659 = vrot.lane.b32.xlu0 %v657, 1
  %v660 = vpop.permute.xlu0 %659
  %663 = vrot.lane.b32.xlu0 %v656, 1
  %v664 = vpop.permute.xlu0 %663
  %v665 = vsel %vm232, %v664, %v660
  %v668 = vsel %vm232, %v660, %v664
  %v669 = vsel %vm19, %v668, 0.0
  %v670 = vsel %vm20, %v665, 0.0
  %v671 = vadd.f32 %v626, %v669
  %v672 = vadd.f32 %v627, %v670
  %673 = vset.pattern.permute.xlu0 52
  %674 = vperm.xlu0 %673, %v13
  %v675 = vpop.permute.xlu0 %674
  %v677 = vmul.f32 %v475, %v675
  %v678 = vmul.f32 %v476, %v675
  %679 = vset.pattern.permute.xlu0 53
  %680 = vperm.xlu0 %679, %v13
  %v681 = vpop.permute.xlu0 %680
  %v683 = vmul.f32 %v481, %v681
  %v684 = vmul.f32 %v482, %v681
  %v685 = vadd.f32 %v677, %v683
  %v686 = vadd.f32 %v678, %v684
  %687 = vset.pattern.permute.xlu0 54
  %688 = vperm.xlu0 %687, %v13
  %v689 = vpop.permute.xlu0 %688
  %v691 = vmul.f32 %v487, %v689
  %v692 = vmul.f32 %v488, %v689
  %v693 = vadd.f32 %v685, %v691
  %v694 = vadd.f32 %v686, %v692
  %695 = vset.pattern.permute.xlu0 55
  %696 = vperm.xlu0 %695, %v13
  %v697 = vpop.permute.xlu0 %696
  %v699 = vmul.f32 %v493, %v697
  %v700 = vmul.f32 %v494, %v697
  %v701 = vadd.f32 %v693, %v699
  %v702 = vadd.f32 %v694, %v700
  %v703 = vadd.f32 %v671, %v701
  %v704 = vadd.f32 %v672, %v702
  %705 = vset.pattern.permute.xlu0 56
  %706 = vperm.xlu0 %705, %v13
  %v707 = vpop.permute.xlu0 %706
  %v709 = vmul.f32 %v475, %v707
  %v710 = vmul.f32 %v476, %v707
  %711 = vset.pattern.permute.xlu0 57
  %712 = vperm.xlu0 %711, %v13
  %v713 = vpop.permute.xlu0 %712
  %v715 = vmul.f32 %v481, %v713
  %v716 = vmul.f32 %v482, %v713
  %v717 = vadd.f32 %v709, %v715
  %v718 = vadd.f32 %v710, %v716
  %719 = vset.pattern.permute.xlu0 58
  %720 = vperm.xlu0 %719, %v13
  %v721 = vpop.permute.xlu0 %720
  %v723 = vmul.f32 %v487, %v721
  %v724 = vmul.f32 %v488, %v721
  %v725 = vadd.f32 %v717, %v723
  %v726 = vadd.f32 %v718, %v724
  %727 = vset.pattern.permute.xlu0 59
  %728 = vperm.xlu0 %727, %v13
  %v729 = vpop.permute.xlu0 %728
  %v731 = vmul.f32 %v493, %v729
  %v732 = vmul.f32 %v494, %v729
  %v733 = vadd.f32 %v725, %v731
  %v734 = vadd.f32 %v726, %v732
  %737 = vrot.lane.b32.xlu0 %v733, 127
  %v738 = vpop.permute.xlu0 %737
  %739 = vrot.lane.b32.xlu0 %v734, 127
  %v740 = vpop.permute.xlu0 %739
  %v741 = vsel %vm309, %v738, %v740
  %v745 = vsel %vm309, %v740, %v738
  %v746 = vsel %vm21, %v741, 0.0
  %v747 = vsel %vm22, %v745, 0.0
  %v748 = vadd.f32 %v703, %v746
  %v749 = vadd.f32 %v704, %v747
  %750 = vset.pattern.permute.xlu0 60
  %751 = vperm.xlu0 %750, %v13
  %v752 = vpop.permute.xlu0 %751
  %v754 = vmul.f32 %v475, %v752
  %v755 = vmul.f32 %v476, %v752
  %756 = vset.pattern.permute.xlu0 61
  %757 = vperm.xlu0 %756, %v13
  %v758 = vpop.permute.xlu0 %757
  %v760 = vmul.f32 %v481, %v758
  %v761 = vmul.f32 %v482, %v758
  %v762 = vadd.f32 %v754, %v760
  %v763 = vadd.f32 %v755, %v761
  %764 = vset.pattern.permute.xlu0 62
  %765 = vperm.xlu0 %764, %v13
  %v766 = vpop.permute.xlu0 %765
  %v768 = vmul.f32 %v487, %v766
  %v769 = vmul.f32 %v488, %v766
  %v770 = vadd.f32 %v762, %v768
  %v771 = vadd.f32 %v763, %v769
  %772 = vset.pattern.permute.xlu0 63
  %773 = vperm.xlu0 %772, %v13
  %v774 = vpop.permute.xlu0 %773
  %v776 = vmul.f32 %v493, %v774
  %v777 = vmul.f32 %v494, %v774
  %v778 = vadd.f32 %v770, %v776
  %v779 = vadd.f32 %v771, %v777
  %782 = vrot.lane.b32.xlu0 %v778, 113
  %v783 = vpop.permute.xlu0 %782
  %784 = vrot.lane.b32.xlu0 %v779, 113
  %v785 = vpop.permute.xlu0 %784
  %v786 = vsel %vm355, %v783, %v785
  %v790 = vsel %vm355, %v785, %v783
  %v791 = vsel %vm361, %v786, 0.0
  %v792 = vsel %vm362, %v790, 0.0
  %v793 = vadd.f32 %v748, %v791
  %v794 = vadd.f32 %v749, %v792
  %795 = vset.pattern.permute.xlu0 64
  %796 = vperm.xlu0 %795, %v13
  %v797 = vpop.permute.xlu0 %796
  %v799 = vmul.f32 %v475, %v797
  %v800 = vmul.f32 %v476, %v797
  %801 = vset.pattern.permute.xlu0 65
  %802 = vperm.xlu0 %801, %v13
  %v803 = vpop.permute.xlu0 %802
  %v805 = vmul.f32 %v481, %v803
  %v806 = vmul.f32 %v482, %v803
  %v807 = vadd.f32 %v799, %v805
  %v808 = vadd.f32 %v800, %v806
  %809 = vset.pattern.permute.xlu0 66
  %810 = vperm.xlu0 %809, %v13
  %v811 = vpop.permute.xlu0 %810
  %v813 = vmul.f32 %v487, %v811
  %v814 = vmul.f32 %v488, %v811
  %v815 = vadd.f32 %v807, %v813
  %v816 = vadd.f32 %v808, %v814
  %817 = vset.pattern.permute.xlu0 67
  %818 = vperm.xlu0 %817, %v13
  %v819 = vpop.permute.xlu0 %818
  %v821 = vmul.f32 %v493, %v819
  %v822 = vmul.f32 %v494, %v819
  %v823 = vadd.f32 %v815, %v821
  %v824 = vadd.f32 %v816, %v822
  %827 = vrot.lane.b32.xlu0 %v823, 112
  %v828 = vpop.permute.xlu0 %827
  %829 = vrot.lane.b32.xlu0 %v824, 112
  %v830 = vpop.permute.xlu0 %829
  %v831 = vsel %vm403, %v828, %v830
  %v835 = vsel %vm403, %v830, %v828
  %v836 = vsel %vm25, %v831, 0.0
  %v837 = vsel %vm26, %v835, 0.0
  %v838 = vadd.f32 %v793, %v836
  %v839 = vadd.f32 %v794, %v837
  %840 = vset.pattern.permute.xlu0 68
  %841 = vperm.xlu0 %840, %v13
  %v842 = vpop.permute.xlu0 %841
  %v844 = vmul.f32 %v475, %v842
  %v845 = vmul.f32 %v476, %v842
  %846 = vset.pattern.permute.xlu0 69
  %847 = vperm.xlu0 %846, %v13
  %v848 = vpop.permute.xlu0 %847
  %v850 = vmul.f32 %v481, %v848
  %v851 = vmul.f32 %v482, %v848
  %v852 = vadd.f32 %v844, %v850
  %v853 = vadd.f32 %v845, %v851
  %854 = vset.pattern.permute.xlu0 70
  %855 = vperm.xlu0 %854, %v13
  %v856 = vpop.permute.xlu0 %855
  %v858 = vmul.f32 %v487, %v856
  %v859 = vmul.f32 %v488, %v856
  %v860 = vadd.f32 %v852, %v858
  %v861 = vadd.f32 %v853, %v859
  %862 = vset.pattern.permute.xlu0 71
  %863 = vperm.xlu0 %862, %v13
  %v864 = vpop.permute.xlu0 %863
  %v866 = vmul.f32 %v493, %v864
  %v867 = vmul.f32 %v494, %v864
  %v868 = vadd.f32 %v860, %v866
  %v869 = vadd.f32 %v861, %v867
  %872 = vrot.lane.b32.xlu0 %v868, 111
  %v873 = vpop.permute.xlu0 %872
  %874 = vrot.lane.b32.xlu0 %v869, 111
  %v875 = vpop.permute.xlu0 %874
  %v876 = vsel %vm449, %v873, %v875
  %v880 = vsel %vm449, %v875, %v873
  %v881 = vsel %vm455, %v876, 0.0
  %v882 = vsel %vm456, %v880, 0.0
  %v883 = vadd.f32 %v838, %v881
  %v884 = vadd.f32 %v839, %v882
  %v885 = vadd.f32 %v11, %v883
  %v886 = vadd.f32 %v12, %v884
  %887 = vset.pattern.permute.xlu0 73
  %888 = vperm.xlu0 %887, %v13
  %v889 = vpop.permute.xlu0 %888
  %v891 = vsub.f32 %v885, %v889
  %v892 = vsub.f32 %v886, %v889
  %v893 = vmax.f32 %v891, 0.0
  %v894 = vmax.f32 %v892, 0.0
  %v895 = vadd.f32 %v893, %v889
  %v896 = vadd.f32 %v894, %v889
  %897 = vst [vmem:[%s2] sm:$0xff] %v895
  %898 = vst [vmem:[%s2 + $0x8] sm:$0xff] %v896
  // Predicated region
  $region10: #{resblock_forward.1} parent=0 // pred_check
    _
  $region11: #{resblock_forward.1} parent=0 // pred_check_branch
    %900 = sbr.rel (0) target = $region13
  $region12: #{resblock_forward.1} parent=0 // pred_region
    _
  $region13: #{resblock_forward.1} parent=0 // pred_fallthru
    _
  // Predicated region
  $region14: #{resblock_forward.1} parent=0 // pred_check
    _
  $region15: #{resblock_forward.1} parent=0 // pred_check_branch
    %902 = sbr.rel (0) target = $region17
  $region16: #{resblock_forward.1} parent=0 // pred_region
    _
  $region17: #{resblock_forward.1} parent=0 // pred_fallthru
    _

</llo_original>
